<compile_context>
chip_gen: v5e
topology: v5e:2x2
jax: 0.10.0
libtpu: 0.0.40
codegen_flags: <defaults>
</compile_context>

<pallas_src>
import jax
import jax.numpy as jnp
from jax.experimental import pallas as pl
from jax.experimental.pallas import tpu as pltpu


def mil_kernel(x_ref, w1_ref, w2a_ref, sp_ref, cp_ref, bias_ref, cmat_ref,
               out_ref):
    # --- unpack the small packed parameters (packed to cut DMA count) -------
    b1 = sp_ref[0:1, :]                  # (1, 128)  feature_ex L1 bias
    b2a = sp_ref[1:2, 0:24]              # (1, 24)   [b2 | folded ba1']
    wa2r = sp_ref[2:3, 0:8]              # (1, 8)    attention L2 weight (row)
    bc1 = sp_ref[3:4, 0:8]               # (1, 8)    classifier L1 bias
    bc2p = sp_ref[4:5, :]                # (1, 128)  bc2 in lanes [0, n_class)
    wc1 = cp_ref[0:16, 0:8]              # (16, 8)   classifier L1 weight
    wc2p = cp_ref[16:24, :]              # (8, 128)  wc2 scattered to lanes [0, n_class)

    # --- feature extractor layer 1: bf16 inputs, f32 MXU accumulation -------
    h1 = jnp.dot(x_ref[...], w1_ref[...],
                 preferred_element_type=jnp.float32) + b1
    h1 = jnp.maximum(h1, 0.0)                                    # (M, 128) f32

    # --- fused [feature_ex L2 | folded attention L1]: one (128,24) bf16 matmul
    ha = jnp.dot(h1.astype(jnp.bfloat16), w2a_ref[...],
                 preferred_element_type=jnp.float32) + b2a       # (M, 24)
    h = ha[:, 0:16]                                              # (M, 16)
    a1 = jnp.maximum(ha[:, 16:24], 0.0)                          # (M, 8)

    # --- attention logits: VPU multiply + XLU lane reduce (no 8x1 MXU op) ---
    a_logit = jnp.sum(a1 * wa2r, axis=-1, keepdims=True)         # (M, 1)
    a_row = jnp.transpose(a_logit)                               # (1, M)

    # --- per-bag softmax: hoisted block-diagonal additive bias (0 / -inf) ---
    logits = a_row + bias_ref[...]                               # (TB, M)
    l_max = jnp.max(logits, axis=-1, keepdims=True)              # (TB, 1)
    e = jnp.exp(logits - l_max)                                  # 0 off-block
    r = pl.reciprocal(jnp.sum(e, axis=-1, keepdims=True), approx=True)
    e16 = e.astype(jnp.bfloat16)

    # --- attention pooling: z[b] = sum_i a_n[b,i] * h[b*N+i] ----------------
    # e's row b is zero outside bag b's own column block, so one well-shaped
    # (TB, M) @ (M, 16) matmul does all TB bag reductions at once.
    z = jnp.dot(e16, h.astype(jnp.bfloat16),
                preferred_element_type=jnp.float32) * r          # (TB, 16)

    # a_n compacted to (TB, N) AND scattered into output lanes [16, 16+N) by
    # the precomputed (M, 128) one-hot matrix; zeros in all other lanes.
    an_packed = jnp.dot(e16, cmat_ref[...],
                        preferred_element_type=jnp.float32) * r  # (TB, 128)

    # --- classifier (tiny; wc2p scatters prob into lanes [0, n_class)) ------
    c1 = jnp.maximum(
        jnp.dot(z, wc1, preferred_element_type=jnp.float32) + bc1, 0.0)
    prob_packed = jnp.dot(c1, wc2p,
                          preferred_element_type=jnp.float32) + bc2p  # (TB, 128)

    # Single full-width, unmasked vreg store of the packed output tile.
    out_ref[...] = prob_packed + an_packed


def _pack_params(params, n_class):
    """Host-side (one-time) parameter preparation."""
    assert n_class <= 8, "packed classifier / output layout assumes n_class <= 8"

    # Fold attention L1 through feature_ex L2 (exact: no ReLU between them).
    wa1p = params["w2"] @ params["wa1"]                      # (128, 8)
    ba1p = params["b2"] @ params["wa1"] + params["ba1"]      # (1, 8)
    w2a = jnp.concatenate([params["w2"], wa1p], axis=1)      # (128, 24)
    b2a = jnp.concatenate([params["b2"], ba1p], axis=1)      # (1, 24)

    sp = jnp.zeros((8, 128), jnp.float32)
    sp = sp.at[0, :].set(params["b1"][0])
    sp = sp.at[1, :24].set(b2a[0])
    sp = sp.at[2, :8].set(params["wa2"][:, 0])
    sp = sp.at[3, :8].set(params["bc1"][0])
    sp = sp.at[4, :n_class].set(params["bc2"][0])
    # params["ba2"] intentionally dropped: softmax(a + c) == softmax(a).

    # Classifier weights, with wc2 pre-scattered to output lanes [0, n_class).
    cp = jnp.zeros((24, 128), jnp.float32)
    cp = cp.at[0:16, 0:8].set(params["wc1"])
    cp = cp.at[16:24, 0:n_class].set(params["wc2"])

    w1 = params["w1"].astype(jnp.bfloat16)                   # dominant bytes
    w2a = w2a.astype(jnp.bfloat16)
    return w1, w2a, sp, cp


def _make_constants(tb, n):
    """Grid-invariant constants, built once on the host, VMEM-resident."""
    m = tb * n
    # Block-diagonal softmax bias: 0 for columns inside the bag, -inf outside.
    col_bag = (jnp.arange(m, dtype=jnp.int32) // n)[None, :]     # (1, M)
    row_bag = jnp.arange(tb, dtype=jnp.int32)[:, None]           # (TB, 1)
    bias = jnp.where(col_bag == row_bag,
                     jnp.float32(0.0), jnp.float32(-jnp.inf))    # (TB, M)
    # Compaction matrix: one-hot of "position within bag", placed directly in
    # output lanes [16, 16+N) of the packed (TB, 128) output tile.
    pos = jnp.arange(m) % n                                      # (M,)
    cmat = jnp.zeros((m, 128), jnp.float32)
    cmat = cmat.at[jnp.arange(m), 16 + pos].set(1.0)
    return bias, cmat.astype(jnp.bfloat16)


def mil_forward(x_bags, params, n_class, *, bags_per_step=32):
    """x_bags: (B, N, 784).  B == 1 reproduces the original module's forward."""
    B, N, D = x_bags.shape
    assert D == 784
    assert n_class <= 8, "packed layouts assume n_class <= 8"
    assert N <= 112, "packed output layout stores a_n in lanes [16, 16+N)"
    TB = min(bags_per_step, B)
    assert B % TB == 0, "B must be divisible by bags_per_step"
    M = TB * N
    assert (M % 8 == 0) or (TB == B)
    assert (TB % 8 == 0) or (TB == B)

    w1, w2a, sp, cp = _pack_params(params, n_class)
    bias, cmat = _make_constants(TB, N)
    x_flat = x_bags.reshape(B * N, D).astype(jnp.bfloat16)

    packed = pl.pallas_call(
        mil_kernel,
        grid=(B // TB,),
        in_specs=[
            pl.BlockSpec((M, D), lambda b: (b, 0)),       # x: per-step block
            pl.BlockSpec((784, 128), lambda b: (0, 0)),   # weights: resident
            pl.BlockSpec((128, 24), lambda b: (0, 0)),
            pl.BlockSpec((8, 128), lambda b: (0, 0)),
            pl.BlockSpec((24, 128), lambda b: (0, 0)),
            pl.BlockSpec((TB, M), lambda b: (0, 0)),      # softmax block-diag bias
            pl.BlockSpec((M, 128), lambda b: (0, 0)),     # a_n compaction/scatter
        ],
        out_specs=pl.BlockSpec((TB, 128), lambda b: (b, 0)),
        out_shape=jax.ShapeDtypeStruct((B, 128), jnp.float32),
        compiler_params=pltpu.CompilerParams(
            dimension_semantics=("parallel",),
            vmem_limit_bytes=32 * 1024 * 1024),
    )(x_flat, w1, w2a, sp, cp, bias, cmat)

    # Cheap host-side (XLA) slices of the lane-dense packed output.
    prob = packed[:, :n_class]
    a_n = packed[:, 16:16 + N]
    return prob, a_n


def make_params(key, n_class):
    # Deterministic synthetic init (PyTorch-Linear shapes, stored as (in, out)).
    ks = jax.random.split(key, 12)

    def u(k, shape, fan_in):
        bound = 1.0 / jnp.sqrt(fan_in)
        return jax.random.uniform(k, shape, jnp.float32, -bound, bound)

    return {
        # feature_ex
        "w1": u(ks[0], (784, 128), 784.0), "b1": u(ks[1], (1, 128), 784.0),
        "w2": u(ks[2], (128, 16), 128.0), "b2": u(ks[3], (1, 16), 128.0),
        # attention
        "wa1": u(ks[4], (16, 8), 16.0), "ba1": u(ks[5], (1, 8), 16.0),
        "wa2": u(ks[6], (8, 1), 8.0), "ba2": u(ks[7], (1, 1), 8.0),
        # classifier
        "wc1": u(ks[8], (16, 8), 16.0), "bc1": u(ks[9], (1, 8), 16.0),
        "wc2": u(ks[10], (8, n_class), 8.0), "bc2": u(ks[11], (1, n_class), 8.0),
    }


def mil_reference(x_bags, p):
    # Pure-JAX f32 reference of the PyTorch forward, batched over bags.
    def one_bag(x):
        h = jnp.maximum(x @ p["w1"] + p["b1"], 0.0) @ p["w2"] + p["b2"]
        a = jnp.maximum(h @ p["wa1"] + p["ba1"], 0.0) @ p["wa2"] + p["ba2"]
        a_n = jax.nn.softmax(jnp.transpose(a), axis=1)       # (1, N)
        z = a_n @ h
        prob = jnp.maximum(z @ p["wc1"] + p["bc1"], 0.0) @ p["wc2"] + p["bc2"]
        return prob[0], a_n[0]

    return jax.vmap(one_bag)(x_bags)


if __name__ == "__main__":
    n_class = 2
    N = 8            # instances per bag
    B = 64           # bags batched into one pallas_call

    key = jax.random.PRNGKey(0)
    kx, kp = jax.random.split(key)
    x_bags = jax.random.normal(kx, (B, N, 784), dtype=jnp.float32)
    params = make_params(kp, n_class)

    # bags_per_step=32 -> grid=2 (even: one step per v7x TensorCore; M=256
    # fills the v6e/v7x MXU row dim; halves grid-step overhead on v5e/v6e).
    prob, a_n = mil_forward(x_bags, params, n_class, bags_per_step=32)
    jax.block_until_ready((prob, a_n))

    prob_ref, a_n_ref = mil_reference(x_bags, params)
    assert prob.shape == (B, n_class) and a_n.shape == (B, N)
    # bf16 x/w1/w2a/pooling operands and the approximate reciprocal => looser
    # tolerance than a pure-f32 comparison.
    assert jnp.allclose(prob, prob_ref, atol=3e-2, rtol=3e-2)
    assert jnp.allclose(a_n, a_n_ref, atol=3e-2, rtol=3e-2)

    print("KERNEL_OK")
</pallas_src>

<mosaic_0001>
module attributes {stable_mosaic.version = 11 : i64} {
  func.func @mil_kernel(%arg0: i32, %arg1: memref<256x784xbf16, #tpu.memory_space<vmem>>, %arg2: memref<784x128xbf16, #tpu.memory_space<vmem>>, %arg3: memref<128x24xbf16, #tpu.memory_space<vmem>>, %arg4: memref<8x128xf32, #tpu.memory_space<vmem>>, %arg5: memref<24x128xf32, #tpu.memory_space<vmem>>, %arg6: memref<32x256xf32, #tpu.memory_space<vmem>>, %arg7: memref<256x128xbf16, #tpu.memory_space<vmem>>, %arg8: memref<32x128xf32, #tpu.memory_space<vmem>>) attributes {dimension_semantics = [#tpu.dimension_semantics<parallel>], iteration_bounds = array<i64: 2>, scalar_prefetch = 0 : i64, scratch_operands = 0 : i64, tpu.core_type = #tpu.core_type<tc>, window_params = [{transform_indices = @transform_0, window_bounds = array<i64: 256, 784>}, {pipeline_mode = #tpu.pipeline_mode<synchronous>, transform_indices = @transform_1, window_bounds = array<i64: 784, 128>}, {pipeline_mode = #tpu.pipeline_mode<synchronous>, transform_indices = @transform_2, window_bounds = array<i64: 128, 24>}, {pipeline_mode = #tpu.pipeline_mode<synchronous>, transform_indices = @transform_3, window_bounds = array<i64: 8, 128>}, {pipeline_mode = #tpu.pipeline_mode<synchronous>, transform_indices = @transform_4, window_bounds = array<i64: 24, 128>}, {pipeline_mode = #tpu.pipeline_mode<synchronous>, transform_indices = @transform_5, window_bounds = array<i64: 32, 256>}, {pipeline_mode = #tpu.pipeline_mode<synchronous>, transform_indices = @transform_6, window_bounds = array<i64: 256, 128>}, {transform_indices = @transform_7, window_bounds = array<i64: 32, 128>}]} {
    %c0 = arith.constant 0 : index
    %c0_0 = arith.constant 0 : index
    %0 = vector.load %arg4[%c0, %c0_0] : memref<8x128xf32, #tpu.memory_space<vmem>>, vector<1x128xf32>
    %c1 = arith.constant 1 : index
    %c0_1 = arith.constant 0 : index
    %1 = vector.load %arg4[%c1, %c0_1] : memref<8x128xf32, #tpu.memory_space<vmem>>, vector<1x24xf32>
    %c2 = arith.constant 2 : index
    %c0_2 = arith.constant 0 : index
    %2 = vector.load %arg4[%c2, %c0_2] : memref<8x128xf32, #tpu.memory_space<vmem>>, vector<1x8xf32>
    %c3 = arith.constant 3 : index
    %c0_3 = arith.constant 0 : index
    %3 = vector.load %arg4[%c3, %c0_3] : memref<8x128xf32, #tpu.memory_space<vmem>>, vector<1x8xf32>
    %c4 = arith.constant 4 : index
    %c0_4 = arith.constant 0 : index
    %4 = vector.load %arg4[%c4, %c0_4] : memref<8x128xf32, #tpu.memory_space<vmem>>, vector<1x128xf32>
    %c0_5 = arith.constant 0 : index
    %c0_6 = arith.constant 0 : index
    %5 = vector.load %arg5[%c0_5, %c0_6] : memref<24x128xf32, #tpu.memory_space<vmem>>, vector<16x8xf32>
    %c16 = arith.constant 16 : index
    %c0_7 = arith.constant 0 : index
    %6 = vector.load %arg5[%c16, %c0_7] : memref<24x128xf32, #tpu.memory_space<vmem>>, vector<8x128xf32>
    %c0_8 = arith.constant 0 : index
    %c0_9 = arith.constant 0 : index
    %7 = vector.load %arg1[%c0_8, %c0_9] : memref<256x784xbf16, #tpu.memory_space<vmem>>, vector<256x784xbf16>
    %c0_10 = arith.constant 0 : index
    %c0_11 = arith.constant 0 : index
    %8 = vector.load %arg2[%c0_10, %c0_11] : memref<784x128xbf16, #tpu.memory_space<vmem>>, vector<784x128xbf16>
    %cst = arith.constant dense<0.000000e+00> : vector<256x128xf32>
    %9 = tpu.matmul %7, %8, %cst {dimension_numbers = #tpu.dot_dimension_numbers<[1], [0], [0], [1], [0, 0, 1, 1], [], []>} : vector<256x784xbf16>, vector<784x128xbf16>, vector<256x128xf32> -> vector<256x128xf32>
    %10 = vector.broadcast %0 : vector<1x128xf32> to vector<256x128xf32>
    %11 = arith.addf %9, %10 : vector<256x128xf32>
    %cst_12 = arith.constant 0.000000e+00 : f32
    %12 = vector.broadcast %cst_12 : f32 to vector<256x128xf32>
    %13 = arith.maximumf %11, %12 : vector<256x128xf32>
    %14 = arith.truncf %13 : vector<256x128xf32> to vector<256x128xbf16>
    %c0_13 = arith.constant 0 : index
    %c0_14 = arith.constant 0 : index
    %15 = vector.load %arg3[%c0_13, %c0_14] : memref<128x24xbf16, #tpu.memory_space<vmem>>, vector<128x24xbf16>
    %cst_15 = arith.constant dense<0.000000e+00> : vector<256x24xf32>
    %16 = tpu.matmul %14, %15, %cst_15 {dimension_numbers = #tpu.dot_dimension_numbers<[1], [0], [0], [1], [0, 0, 1, 1], [], []>} : vector<256x128xbf16>, vector<128x24xbf16>, vector<256x24xf32> -> vector<256x24xf32>
    %17 = vector.broadcast %1 : vector<1x24xf32> to vector<256x24xf32>
    %18 = arith.addf %16, %17 : vector<256x24xf32>
    %19 = vector.extract_strided_slice %18 {offsets = [0, 0], sizes = [256, 16], strides = [1, 1]} : vector<256x24xf32> to vector<256x16xf32>
    %20 = vector.extract_strided_slice %18 {offsets = [0, 16], sizes = [256, 8], strides = [1, 1]} : vector<256x24xf32> to vector<256x8xf32>
    %cst_16 = arith.constant 0.000000e+00 : f32
    %21 = vector.broadcast %cst_16 : f32 to vector<256x8xf32>
    %22 = arith.maximumf %20, %21 : vector<256x8xf32>
    %23 = vector.broadcast %2 : vector<1x8xf32> to vector<256x8xf32>
    %24 = arith.mulf %22, %23 : vector<256x8xf32>
    %cst_17 = arith.constant dense<0.000000e+00> : vector<256xf32>
    %25 = vector.multi_reduction <add>, %24, %cst_17 [1] : vector<256x8xf32> to vector<256xf32>
    %26 = vector.shape_cast %25 : vector<256xf32> to vector<256x1xf32>
    %27 = tpu.transpose %26, [1, 0] : vector<256x1xf32> -> vector<1x256xf32>
    %c0_18 = arith.constant 0 : index
    %c0_19 = arith.constant 0 : index
    %28 = vector.load %arg6[%c0_18, %c0_19] : memref<32x256xf32, #tpu.memory_space<vmem>>, vector<32x256xf32>
    %29 = vector.broadcast %27 : vector<1x256xf32> to vector<32x256xf32>
    %30 = arith.addf %29, %28 : vector<32x256xf32>
    %cst_20 = arith.constant dense<0xFF800000> : vector<32xf32>
    %31 = vector.multi_reduction <maximumf>, %30, %cst_20 [1] : vector<32x256xf32> to vector<32xf32>
    %32 = vector.shape_cast %31 : vector<32xf32> to vector<32x1xf32>
    %33 = vector.broadcast %32 : vector<32x1xf32> to vector<32x256xf32>
    %34 = arith.subf %30, %33 : vector<32x256xf32>
    %35 = math.exp %34 : vector<32x256xf32>
    %cst_21 = arith.constant dense<0.000000e+00> : vector<32xf32>
    %36 = vector.multi_reduction <add>, %35, %cst_21 [1] : vector<32x256xf32> to vector<32xf32>
    %37 = vector.shape_cast %36 : vector<32xf32> to vector<32x1xf32>
    %38 = tpu.reciprocal %37 {approx = true} : vector<32x1xf32> -> vector<32x1xf32>
    %39 = arith.truncf %35 : vector<32x256xf32> to vector<32x256xbf16>
    %40 = arith.truncf %19 : vector<256x16xf32> to vector<256x16xbf16>
    %cst_22 = arith.constant dense<0.000000e+00> : vector<32x16xf32>
    %41 = tpu.matmul %39, %40, %cst_22 {dimension_numbers = #tpu.dot_dimension_numbers<[1], [0], [0], [1], [0, 0, 1, 1], [], []>} : vector<32x256xbf16>, vector<256x16xbf16>, vector<32x16xf32> -> vector<32x16xf32>
    %42 = vector.broadcast %38 : vector<32x1xf32> to vector<32x16xf32>
    %43 = arith.mulf %41, %42 : vector<32x16xf32>
    %c0_23 = arith.constant 0 : index
    %c0_24 = arith.constant 0 : index
    %44 = vector.load %arg7[%c0_23, %c0_24] : memref<256x128xbf16, #tpu.memory_space<vmem>>, vector<256x128xbf16>
    %cst_25 = arith.constant dense<0.000000e+00> : vector<32x128xf32>
    %45 = tpu.matmul %39, %44, %cst_25 {dimension_numbers = #tpu.dot_dimension_numbers<[1], [0], [0], [1], [0, 0, 1, 1], [], []>} : vector<32x256xbf16>, vector<256x128xbf16>, vector<32x128xf32> -> vector<32x128xf32>
    %46 = vector.broadcast %38 : vector<32x1xf32> to vector<32x128xf32>
    %47 = arith.mulf %45, %46 : vector<32x128xf32>
    %cst_26 = arith.constant dense<0.000000e+00> : vector<32x8xf32>
    %48 = tpu.matmul %43, %5, %cst_26 {dimension_numbers = #tpu.dot_dimension_numbers<[1], [0], [0], [1], [0, 0, 1, 1], [], []>} : vector<32x16xf32>, vector<16x8xf32>, vector<32x8xf32> -> vector<32x8xf32>
    %49 = vector.broadcast %3 : vector<1x8xf32> to vector<32x8xf32>
    %50 = arith.addf %48, %49 : vector<32x8xf32>
    %cst_27 = arith.constant 0.000000e+00 : f32
    %51 = vector.broadcast %cst_27 : f32 to vector<32x8xf32>
    %52 = arith.maximumf %50, %51 : vector<32x8xf32>
    %cst_28 = arith.constant dense<0.000000e+00> : vector<32x128xf32>
    %53 = tpu.matmul %52, %6, %cst_28 {dimension_numbers = #tpu.dot_dimension_numbers<[1], [0], [0], [1], [0, 0, 1, 1], [], []>} : vector<32x8xf32>, vector<8x128xf32>, vector<32x128xf32> -> vector<32x128xf32>
    %54 = vector.broadcast %4 : vector<1x128xf32> to vector<32x128xf32>
    %55 = arith.addf %53, %54 : vector<32x128xf32>
    %56 = arith.addf %55, %47 : vector<32x128xf32>
    %c0_29 = arith.constant 0 : index
    %c0_30 = arith.constant 0 : index
    %57 = vector.load %arg8[%c0_29, %c0_30] : memref<32x128xf32, #tpu.memory_space<vmem>>, vector<32x128xf32>
    tpu.vector_store %arg8[%c0_29, %c0_30], %56 {strides = array<i32>} : memref<32x128xf32, #tpu.memory_space<vmem>>, vector<32x128xf32>,
    return
  }
  func.func @transform_0(%arg0: i32) -> (i32, i32) {
    %c0_i32 = arith.constant 0 : i32
    %c0_i32_0 = arith.constant 0 : i32
    return %arg0, %c0_i32 : i32, i32
  }
  func.func @transform_1(%arg0: i32) -> (i32, i32) {
    %c0_i32 = arith.constant 0 : i32
    %c0_i32_0 = arith.constant 0 : i32
    %c0_i32_1 = arith.constant 0 : i32
    return %c0_i32, %c0_i32_0 : i32, i32
  }
  func.func @transform_2(%arg0: i32) -> (i32, i32) {
    %c0_i32 = arith.constant 0 : i32
    %c0_i32_0 = arith.constant 0 : i32
    %c0_i32_1 = arith.constant 0 : i32
    return %c0_i32, %c0_i32_0 : i32, i32
  }
  func.func @transform_3(%arg0: i32) -> (i32, i32) {
    %c0_i32 = arith.constant 0 : i32
    %c0_i32_0 = arith.constant 0 : i32
    %c0_i32_1 = arith.constant 0 : i32
    return %c0_i32, %c0_i32_0 : i32, i32
  }
  func.func @transform_4(%arg0: i32) -> (i32, i32) {
    %c0_i32 = arith.constant 0 : i32
    %c0_i32_0 = arith.constant 0 : i32
    %c0_i32_1 = arith.constant 0 : i32
    return %c0_i32, %c0_i32_0 : i32, i32
  }
  func.func @transform_5(%arg0: i32) -> (i32, i32) {
    %c0_i32 = arith.constant 0 : i32
    %c0_i32_0 = arith.constant 0 : i32
    %c0_i32_1 = arith.constant 0 : i32
    return %c0_i32, %c0_i32_0 : i32, i32
  }
  func.func @transform_6(%arg0: i32) -> (i32, i32) {
    %c0_i32 = arith.constant 0 : i32
    %c0_i32_0 = arith.constant 0 : i32
    %c0_i32_1 = arith.constant 0 : i32
    return %c0_i32, %c0_i32_0 : i32, i32
  }
  func.func @transform_7(%arg0: i32) -> (i32, i32) {
    %c0_i32 = arith.constant 0 : i32
    %c0_i32_0 = arith.constant 0 : i32
    return %arg0, %c0_i32 : i32, i32
  }
}

</mosaic_0001>

<llo_original>
// kernel: tpu_custom_call.1
$region0: #{tpu_custom_call.1}
  #allocation0 [shape = 'u32[]', space=smem, size = 0x4, offset = 0x4, fixed_abs, tag = 'smem constant byte address 0x4 - core index']
  #allocation1 [shape = 'u32[72,128]{1,0:T(1,128)}', space=vmem, size = 0x9000, scoped, tag = 'internal scratch']
  %s0 = inlined_call_operand.vmem [shape: bf16[512,784], index: 0, kind: input, shape index: {}]
  %s1 = inlined_call_operand.vmem [shape: bf16[784,128], index: 1, kind: input, shape index: {}]
  %s2 = inlined_call_operand.vmem [shape: bf16[128,24], index: 2, kind: input, shape index: {}]
  %s3 = inlined_call_operand.vmem [shape: f32[8,128], index: 3, kind: input, shape index: {}]
  %s4 = inlined_call_operand.vmem [shape: f32[24,128], index: 4, kind: input, shape index: {}]
  %s5 = inlined_call_operand.vmem [shape: f32[32,256], index: 5, kind: input, shape index: {}]
  %s6 = inlined_call_operand.vmem [shape: bf16[256,128], index: 6, kind: input, shape index: {}]
  %s7 = inlined_call_operand.hbm [shape: f32[64,128], index: 7, kind: output, shape index: {}]
  %s8 = sld [smem:[#allocation0]]
  $region61: #{tpu_custom_call.1} parent=0
    _
  %s10 = ssub.s32 1, %s8
  %s11 = scalar_select 0, %s10, %s8
  $region1: #{tpu_custom_call.1} parent=0
    #allocation2 [shape = 'u8[32768]{0}', space=vmem, size = 0x8000, scoped, tag = 'output window, operand 0']
    #allocation3 [shape = 's32[2]{0}', space=sflag, size = 0x8, scoped, tag = 'scoped memory for tpu_custom_call.1']
    %12 = vsyncpa [#allocation3], 0
    %s13 = scalar_lea.sflag [#allocation3], 1
    %14 = vsyncpa %s13, 0
    loop: start=0, step=1, limit=4
    $region2: #{tpu_custom_call.1} parent=1 // loop_pre_header
      _
    $region3: #{tpu_custom_call.1} parent=1 // loop_header
      %s16 = sphi 0, %s20
      %p17 = scmp.ge.s32.totalorder %s16, 4
      %s26 = sphi 0, %s28
      %s29 = sphi 0, %s26
      %s30 = sphi 0, %s29
      %s46 = sphi 0, %s30
      %s50 = sphi 0, %s50
      %s52 = sphi 0, %s50
      %s53 = sphi 0, %s52
      %s67 = sphi 0, %s53
      %s71 = sphi 0, %s71
      %s73 = sphi 0, %s71
      %s74 = sphi 0, %s73
      %s88 = sphi 0, %s74
      %s92 = sphi 0, %s92
      %s94 = sphi 0, %s92
      %s95 = sphi 0, %s94
      %s109 = sphi 0, %s95
      %s113 = sphi 0, %s113
      %s115 = sphi 0, %s113
      %s116 = sphi 0, %s115
      %s130 = sphi 0, %s116
      %s134 = sphi 0, %s134
      %s136 = sphi 0, %s134
      %s137 = sphi 0, %s136
      %s151 = sphi 0, %s137
      %s155 = sphi 0, %s155
      %s157 = sphi 0, %s155
      %s158 = sphi 0, %s157
      %s172 = sphi 0, %s158
      %s178 = sphi 0, %s180
      %s181 = sphi 0, %s178
      %s182 = sphi 0, %s181
      %s198 = sphi 0, %s182
    $region4: #{tpu_custom_call.1} parent=1 // loop_header_branch
      %19 = sbr.rel (%p17) target = $region8
    $region5: #{tpu_custom_call.1} parent=1 // loop_body
      %s21 = ssub.s32 %s16, 1
      %s22 = ssub.s32 %s16, 2
      %s23 = sadd.s32 %s16, 1
      %s24 = ssub.s32 %s16, %s23
      %p25 = scmp.eq.s32.totalorder %s24, 0
      %s27 = sadd.s32 %s26, 1
      %s28 = scalar_select %p25, %s26, %s27
      %p31 = pneg %p25
      %p32 = scmp.eq.s32.totalorder %s16, 1
      %p33 = por %p31, %p32
      %p34 = scmp.ne.s32.totalorder %s26, %s29
      %p35 = scmp.eq.s32.totalorder %s16, 0
      %p36 = por %p34, %p35
      %p37 = scmp.ne.s32.totalorder %s26, %s29
      %p38 = scmp.eq.s32.totalorder %s21, 1
      %p39 = por %p37, %p38
      %p40 = scmp.ne.s32.totalorder %s29, %s30
      %p41 = scmp.eq.s32.totalorder %s21, 0
      %p42 = por %p40, %p41
      %p43 = scmp.ne.s32.totalorder %s29, %s30
      %p44 = scmp.eq.s32.totalorder %s22, 1
      %p45 = por %p43, %p44
      %p47 = scmp.ne.s32.totalorder %s30, %s46
      %p48 = scmp.eq.s32.totalorder %s22, 0
      %p49 = por %p47, %p48
      %s51 = sadd.s32 %s50, 1
      %p54 = scmp.eq.s32.totalorder %s16, 1
      %p55 = scmp.ne.s32.totalorder %s50, %s52
      %p56 = scmp.eq.s32.totalorder %s16, 0
      %p57 = por %p55, %p56
      %p58 = scmp.ne.s32.totalorder %s50, %s52
      %p59 = scmp.eq.s32.totalorder %s21, 1
      %p60 = por %p58, %p59
      %p61 = scmp.ne.s32.totalorder %s52, %s53
      %p62 = scmp.eq.s32.totalorder %s21, 0
      %p63 = por %p61, %p62
      %p64 = scmp.ne.s32.totalorder %s52, %s53
      %p65 = scmp.eq.s32.totalorder %s22, 1
      %p66 = por %p64, %p65
      %p68 = scmp.ne.s32.totalorder %s53, %s67
      %p69 = scmp.eq.s32.totalorder %s22, 0
      %p70 = por %p68, %p69
      %s72 = sadd.s32 %s71, 1
      %p75 = scmp.eq.s32.totalorder %s16, 1
      %p76 = scmp.ne.s32.totalorder %s71, %s73
      %p77 = scmp.eq.s32.totalorder %s16, 0
      %p78 = por %p76, %p77
      %p79 = scmp.ne.s32.totalorder %s71, %s73
      %p80 = scmp.eq.s32.totalorder %s21, 1
      %p81 = por %p79, %p80
      %p82 = scmp.ne.s32.totalorder %s73, %s74
      %p83 = scmp.eq.s32.totalorder %s21, 0
      %p84 = por %p82, %p83
      %p85 = scmp.ne.s32.totalorder %s73, %s74
      %p86 = scmp.eq.s32.totalorder %s22, 1
      %p87 = por %p85, %p86
      %p89 = scmp.ne.s32.totalorder %s74, %s88
      %p90 = scmp.eq.s32.totalorder %s22, 0
      %p91 = por %p89, %p90
      %s93 = sadd.s32 %s92, 1
      %p96 = scmp.eq.s32.totalorder %s16, 1
      %p97 = scmp.ne.s32.totalorder %s92, %s94
      %p98 = scmp.eq.s32.totalorder %s16, 0
      %p99 = por %p97, %p98
      %p100 = scmp.ne.s32.totalorder %s92, %s94
      %p101 = scmp.eq.s32.totalorder %s21, 1
      %p102 = por %p100, %p101
      %p103 = scmp.ne.s32.totalorder %s94, %s95
      %p104 = scmp.eq.s32.totalorder %s21, 0
      %p105 = por %p103, %p104
      %p106 = scmp.ne.s32.totalorder %s94, %s95
      %p107 = scmp.eq.s32.totalorder %s22, 1
      %p108 = por %p106, %p107
      %p110 = scmp.ne.s32.totalorder %s95, %s109
      %p111 = scmp.eq.s32.totalorder %s22, 0
      %p112 = por %p110, %p111
      %s114 = sadd.s32 %s113, 1
      %p117 = scmp.eq.s32.totalorder %s16, 1
      %p118 = scmp.ne.s32.totalorder %s113, %s115
      %p119 = scmp.eq.s32.totalorder %s16, 0
      %p120 = por %p118, %p119
      %p121 = scmp.ne.s32.totalorder %s113, %s115
      %p122 = scmp.eq.s32.totalorder %s21, 1
      %p123 = por %p121, %p122
      %p124 = scmp.ne.s32.totalorder %s115, %s116
      %p125 = scmp.eq.s32.totalorder %s21, 0
      %p126 = por %p124, %p125
      %p127 = scmp.ne.s32.totalorder %s115, %s116
      %p128 = scmp.eq.s32.totalorder %s22, 1
      %p129 = por %p127, %p128
      %p131 = scmp.ne.s32.totalorder %s116, %s130
      %p132 = scmp.eq.s32.totalorder %s22, 0
      %p133 = por %p131, %p132
      %s135 = sadd.s32 %s134, 1
      %p138 = scmp.eq.s32.totalorder %s16, 1
      %p139 = scmp.ne.s32.totalorder %s134, %s136
      %p140 = scmp.eq.s32.totalorder %s16, 0
      %p141 = por %p139, %p140
      %p142 = scmp.ne.s32.totalorder %s134, %s136
      %p143 = scmp.eq.s32.totalorder %s21, 1
      %p144 = por %p142, %p143
      %p145 = scmp.ne.s32.totalorder %s136, %s137
      %p146 = scmp.eq.s32.totalorder %s21, 0
      %p147 = por %p145, %p146
      %p148 = scmp.ne.s32.totalorder %s136, %s137
      %p149 = scmp.eq.s32.totalorder %s22, 1
      %p150 = por %p148, %p149
      %p152 = scmp.ne.s32.totalorder %s137, %s151
      %p153 = scmp.eq.s32.totalorder %s22, 0
      %p154 = por %p152, %p153
      %s156 = sadd.s32 %s155, 1
      %p159 = scmp.eq.s32.totalorder %s16, 1
      %p160 = scmp.ne.s32.totalorder %s155, %s157
      %p161 = scmp.eq.s32.totalorder %s16, 0
      %p162 = por %p160, %p161
      %p163 = scmp.ne.s32.totalorder %s155, %s157
      %p164 = scmp.eq.s32.totalorder %s21, 1
      %p165 = por %p163, %p164
      %p166 = scmp.ne.s32.totalorder %s157, %s158
      %p167 = scmp.eq.s32.totalorder %s21, 0
      %p168 = por %p166, %p167
      %p169 = scmp.ne.s32.totalorder %s157, %s158
      %p170 = scmp.eq.s32.totalorder %s22, 1
      %p171 = por %p169, %p170
      %p173 = scmp.ne.s32.totalorder %s158, %s172
      %p174 = scmp.eq.s32.totalorder %s22, 0
      %p175 = por %p173, %p174
      %s176 = ssub.s32 %s16, %s23
      %p177 = scmp.eq.s32.totalorder %s176, 0
      %s179 = sadd.s32 %s178, 1
      %s180 = scalar_select %p177, %s178, %s179
      %p183 = pneg %p177
      %p184 = scmp.eq.s32.totalorder %s16, 1
      %p185 = por %p183, %p184
      %p186 = scmp.ne.s32.totalorder %s178, %s181
      %p187 = scmp.eq.s32.totalorder %s16, 0
      %p188 = por %p186, %p187
      %p189 = scmp.ne.s32.totalorder %s178, %s181
      %p190 = scmp.eq.s32.totalorder %s21, 1
      %p191 = por %p189, %p190
      %p192 = scmp.ne.s32.totalorder %s181, %s182
      %p193 = scmp.eq.s32.totalorder %s21, 0
      %p194 = por %p192, %p193
      %p195 = scmp.ne.s32.totalorder %s181, %s182
      %p196 = scmp.eq.s32.totalorder %s22, 1
      %p197 = por %p195, %p196
      %p199 = scmp.ne.s32.totalorder %s182, %s198
      %p200 = scmp.eq.s32.totalorder %s22, 0
      %p201 = por %p199, %p200
      %p202 = scmp.le.s32.totalorder 1, %s16
      %p203 = scmp.lt.s32.totalorder %s16, 3
      %p204 = pnand %p202, %p203
      %p205 = pneg %p204
      // Predicated region
      $region9: #{tpu_custom_call.1} parent=5 // pred_check
        _
      $region10: #{tpu_custom_call.1} parent=5 // pred_check_branch
        %207 = sbr.rel (%p204) target = $region12
      $region11: #{tpu_custom_call.1} parent=5 // pred_region
        %s208 = ssub.s32 %s16, 1
        // Predicated region
        $region13: #{tpu_custom_call.1} parent=11 // pred_check
          %p209 = pneg %p63
        $region14: #{tpu_custom_call.1} parent=11 // pred_check_branch
          %211 = sbr.rel (%p209) target = $region16
        $region15: #{tpu_custom_call.1} parent=11 // pred_region
          _
        $region16: #{tpu_custom_call.1} parent=11 // pred_fallthru
          _
        // Predicated region
        $region17: #{tpu_custom_call.1} parent=11 // pred_check
          %p212 = pneg %p84
        $region18: #{tpu_custom_call.1} parent=11 // pred_check_branch
          %214 = sbr.rel (%p212) target = $region20
        $region19: #{tpu_custom_call.1} parent=11 // pred_region
          _
        $region20: #{tpu_custom_call.1} parent=11 // pred_fallthru
          _
        // Predicated region
        $region21: #{tpu_custom_call.1} parent=11 // pred_check
          %p215 = pneg %p105
        $region22: #{tpu_custom_call.1} parent=11 // pred_check_branch
          %217 = sbr.rel (%p215) target = $region24
        $region23: #{tpu_custom_call.1} parent=11 // pred_region
          _
        $region24: #{tpu_custom_call.1} parent=11 // pred_fallthru
          _
        // Predicated region
        $region25: #{tpu_custom_call.1} parent=11 // pred_check
          %p218 = pneg %p126
        $region26: #{tpu_custom_call.1} parent=11 // pred_check_branch
          %220 = sbr.rel (%p218) target = $region28
        $region27: #{tpu_custom_call.1} parent=11 // pred_region
          _
        $region28: #{tpu_custom_call.1} parent=11 // pred_fallthru
          _
        // Predicated region
        $region29: #{tpu_custom_call.1} parent=11 // pred_check
          %p221 = pneg %p147
        $region30: #{tpu_custom_call.1} parent=11 // pred_check_branch
          %223 = sbr.rel (%p221) target = $region32
        $region31: #{tpu_custom_call.1} parent=11 // pred_region
          _
        $region32: #{tpu_custom_call.1} parent=11 // pred_fallthru
          _
        // Predicated region
        $region33: #{tpu_custom_call.1} parent=11 // pred_check
          %p224 = pneg %p168
        $region34: #{tpu_custom_call.1} parent=11 // pred_check_branch
          %226 = sbr.rel (%p224) target = $region36
        $region35: #{tpu_custom_call.1} parent=11 // pred_region
          _
        $region36: #{tpu_custom_call.1} parent=11 // pred_fallthru
          _
      $region12: #{tpu_custom_call.1} parent=5 // pred_fallthru
        _
      %p227 = scmp.lt.s32.totalorder %s16, 2
      // Predicated region
      $region37: #{tpu_custom_call.1} parent=5 // pred_check
        %p228 = pneg %p227
      $region38: #{tpu_custom_call.1} parent=5 // pred_check_branch
        %230 = sbr.rel (%p228) target = $region40
      $region39: #{tpu_custom_call.1} parent=5 // pred_region
        // Predicated region
        $region41: #{tpu_custom_call.1} parent=39 // pred_check
          %p231 = pneg %p36
        $region42: #{tpu_custom_call.1} parent=39 // pred_check_branch
          %233 = sbr.rel (%p231) target = $region44
        $region43: #{tpu_custom_call.1} parent=39 // pred_region
          %s234 = smul.u32 32, %s16
          %p235 = scmp.lt.s32.totalorder %s234, 63
          %s236 = scalar_select %p235, %s234, 63
          %s237 = smul.addr %s236, 7
          %s238 = smul.addr %s237, 4
          %s239 = scalar_lea.vmem %s0, %s238
          %s240 = smul.u32 32, %s16
        $region44: #{tpu_custom_call.1} parent=39 // pred_fallthru
          _
      $region40: #{tpu_custom_call.1} parent=5 // pred_fallthru
        _
      %p241 = scmp.le.s32.totalorder 1, %s16
      %p242 = scmp.lt.s32.totalorder %s16, 3
      %p243 = pnand %p241, %p242
      %p244 = pneg %p243
      // Predicated region
      $region45: #{tpu_custom_call.1} parent=5 // pred_check
        _
      $region46: #{tpu_custom_call.1} parent=5 // pred_check_branch
        %246 = sbr.rel (%p243) target = $region48
      $region47: #{tpu_custom_call.1} parent=5 // pred_region
        %s247 = ssub.s32 %s16, 1
        %s248 = smul.u32 32, %s21
        %p249 = scmp.lt.s32.totalorder %s248, 63
        %s250 = scalar_select %p249, %s248, 63
        %s251 = smul.addr %s250, 7
        %s252 = smul.addr %s251, 4
        %s253 = scalar_lea.vmem %s0, %s252
        %p254 = pneg %p42
        %p255 = pneg %p39
        %p256 = pneg %p63
        %p257 = pneg %p60
        %p258 = pneg %p84
        %p259 = pneg %p81
        %p260 = pneg %p105
        %p261 = pneg %p102
        %p262 = pneg %p126
        %p263 = pneg %p123
        %p264 = pneg %p147
        %p265 = pneg %p144
        %p266 = pneg %p168
        %p267 = pneg %p165
        %p268 = pneg %p194
        %p269 = pneg %p191
        %s270 = sand.u32 %s181, 1
        %s271 = scalar_lea.sflag [#allocation3], %s270
        %s272 = sand.u32 %s181, 1
        %s273 = smul.addr %s272, 32
        %s274 = scalar_lea.vmem [#allocation2], %s273
        %s275 = smul.u32 32, %s21
        %p276 = scmp.lt.s32.totalorder %s275, 63
        %s277 = scalar_select %p276, %s275, 63
        %s278 = smul.addr %s277, 7
        %s279 = smul.addr %s278, 4
        %s280 = scalar_lea.vmem %s0, %s279
        %s281 = smul.u32 32, %s21
        %s282 = smul.u32 4, %s21
        %v284 = vld [vmem:[%s3] sm:$0x1]
        %v285 = vld [vmem:[%s3 + $0x1] sm:$0x1]
        %v286 = vld [vmem:[%s3 + $0x2] sm:$0x1]
        %v287 = vld [vmem:[%s3 + $0x3] sm:$0x1]
        %v288 = vld [vmem:[%s3 + $0x4] sm:$0x1]
        %v289 = vld [vmem:[%s4] sm:$0xff]
        %v290 = vld [vmem:[%s4 + $0x8] sm:$0xff]
        %v291 = vld [vmem:[%s4 + $0x10] sm:$0xff]
        %v292 = vld [vmem:[%s280] sm:$0xff]
        %v293 = vld [vmem:[%s280 + $0x8] sm:$0xff]
        %v294 = vld [vmem:[%s280 + $0x10] sm:$0xff]
        %v295 = vld [vmem:[%s280 + $0x18] sm:$0xf]
        %v296 = vld [vmem:[%s280 + $0x1c] sm:$0xff]
        %v297 = vld [vmem:[%s280 + $0x24] sm:$0xff]
        %v298 = vld [vmem:[%s280 + $0x2c] sm:$0xff]
        %v299 = vld [vmem:[%s280 + $0x34] sm:$0xf]
        %v300 = vld [vmem:[%s280 + $0x38] sm:$0xff]
        %v301 = vld [vmem:[%s280 + $0x40] sm:$0xff]
        %v302 = vld [vmem:[%s280 + $0x48] sm:$0xff]
        %v303 = vld [vmem:[%s280 + $0x50] sm:$0xf]
        %v304 = vld [vmem:[%s280 + $0x54] sm:$0xff]
        %v305 = vld [vmem:[%s280 + $0x5c] sm:$0xff]
        %v306 = vld [vmem:[%s280 + $0x64] sm:$0xff]
        %v307 = vld [vmem:[%s280 + $0x6c] sm:$0xf]
        %v308 = vld [vmem:[%s280 + $0x70] sm:$0xff]
        %v309 = vld [vmem:[%s280 + $0x78] sm:$0xff]
        %v310 = vld [vmem:[%s280 + $0x80] sm:$0xff]
        %v311 = vld [vmem:[%s280 + $0x88] sm:$0xf]
        %v312 = vld [vmem:[%s280 + $0x8c] sm:$0xff]
        %v313 = vld [vmem:[%s280 + $0x94] sm:$0xff]
        %v314 = vld [vmem:[%s280 + $0x9c] sm:$0xff]
        %v315 = vld [vmem:[%s280 + $0xa4] sm:$0xf]
        %v316 = vld [vmem:[%s280 + $0xa8] sm:$0xff]
        %v317 = vld [vmem:[%s280 + $0xb0] sm:$0xff]
        %v318 = vld [vmem:[%s280 + $0xb8] sm:$0xff]
        %v319 = vld [vmem:[%s280 + $0xc0] sm:$0xf]
        %v320 = vld [vmem:[%s280 + $0xc4] sm:$0xff]
        %v321 = vld [vmem:[%s280 + $0xcc] sm:$0xff]
        %v322 = vld [vmem:[%s280 + $0xd4] sm:$0xff]
        %v323 = vld [vmem:[%s280 + $0xdc] sm:$0xf]
        %v324 = vld [vmem:[%s280 + $0xe0] sm:$0xff]
        %v325 = vld [vmem:[%s280 + $0xe8] sm:$0xff]
        %v326 = vld [vmem:[%s280 + $0xf0] sm:$0xff]
        %v327 = vld [vmem:[%s280 + $0xf8] sm:$0xf]
        %v328 = vld [vmem:[%s280 + $0xfc] sm:$0xff]
        %v329 = vld [vmem:[%s280 + $0x104] sm:$0xff]
        %v330 = vld [vmem:[%s280 + $0x10c] sm:$0xff]
        %v331 = vld [vmem:[%s280 + $0x114] sm:$0xf]
        %v332 = vld [vmem:[%s280 + $0x118] sm:$0xff]
        %v333 = vld [vmem:[%s280 + $0x120] sm:$0xff]
        %v334 = vld [vmem:[%s280 + $0x128] sm:$0xff]
        %v335 = vld [vmem:[%s280 + $0x130] sm:$0xf]
        %v336 = vld [vmem:[%s280 + $0x134] sm:$0xff]
        %v337 = vld [vmem:[%s280 + $0x13c] sm:$0xff]
        %v338 = vld [vmem:[%s280 + $0x144] sm:$0xff]
        %v339 = vld [vmem:[%s280 + $0x14c] sm:$0xf]
        %v340 = vld [vmem:[%s280 + $0x150] sm:$0xff]
        %v341 = vld [vmem:[%s280 + $0x158] sm:$0xff]
        %v342 = vld [vmem:[%s280 + $0x160] sm:$0xff]
        %v343 = vld [vmem:[%s280 + $0x168] sm:$0xf]
        %v344 = vld [vmem:[%s280 + $0x16c] sm:$0xff]
        %v345 = vld [vmem:[%s280 + $0x174] sm:$0xff]
        %v346 = vld [vmem:[%s280 + $0x17c] sm:$0xff]
        %v347 = vld [vmem:[%s280 + $0x184] sm:$0xf]
        %v348 = vld [vmem:[%s280 + $0x188] sm:$0xff]
        %v349 = vld [vmem:[%s280 + $0x190] sm:$0xff]
        %v350 = vld [vmem:[%s280 + $0x198] sm:$0xff]
        %v351 = vld [vmem:[%s280 + $0x1a0] sm:$0xf]
        %v352 = vld [vmem:[%s280 + $0x1a4] sm:$0xff]
        %v353 = vld [vmem:[%s280 + $0x1ac] sm:$0xff]
        %v354 = vld [vmem:[%s280 + $0x1b4] sm:$0xff]
        %v355 = vld [vmem:[%s280 + $0x1bc] sm:$0xf]
        %v356 = vld [vmem:[%s280 + $0x1c0] sm:$0xff]
        %v357 = vld [vmem:[%s280 + $0x1c8] sm:$0xff]
        %v358 = vld [vmem:[%s280 + $0x1d0] sm:$0xff]
        %v359 = vld [vmem:[%s280 + $0x1d8] sm:$0xf]
        %v360 = vld [vmem:[%s280 + $0x1dc] sm:$0xff]
        %v361 = vld [vmem:[%s280 + $0x1e4] sm:$0xff]
        %v362 = vld [vmem:[%s280 + $0x1ec] sm:$0xff]
        %v363 = vld [vmem:[%s280 + $0x1f4] sm:$0xf]
        %v364 = vld [vmem:[%s280 + $0x1f8] sm:$0xff]
        %v365 = vld [vmem:[%s280 + $0x200] sm:$0xff]
        %v366 = vld [vmem:[%s280 + $0x208] sm:$0xff]
        %v367 = vld [vmem:[%s280 + $0x210] sm:$0xf]
        %v368 = vld [vmem:[%s280 + $0x214] sm:$0xff]
        %v369 = vld [vmem:[%s280 + $0x21c] sm:$0xff]
        %v370 = vld [vmem:[%s280 + $0x224] sm:$0xff]
        %v371 = vld [vmem:[%s280 + $0x22c] sm:$0xf]
        %v372 = vld [vmem:[%s280 + $0x230] sm:$0xff]
        %v373 = vld [vmem:[%s280 + $0x238] sm:$0xff]
        %v374 = vld [vmem:[%s280 + $0x240] sm:$0xff]
        %v375 = vld [vmem:[%s280 + $0x248] sm:$0xf]
        %v376 = vld [vmem:[%s280 + $0x24c] sm:$0xff]
        %v377 = vld [vmem:[%s280 + $0x254] sm:$0xff]
        %v378 = vld [vmem:[%s280 + $0x25c] sm:$0xff]
        %v379 = vld [vmem:[%s280 + $0x264] sm:$0xf]
        %v380 = vld [vmem:[%s280 + $0x268] sm:$0xff]
        %v381 = vld [vmem:[%s280 + $0x270] sm:$0xff]
        %v382 = vld [vmem:[%s280 + $0x278] sm:$0xff]
        %v383 = vld [vmem:[%s280 + $0x280] sm:$0xf]
        %v384 = vld [vmem:[%s280 + $0x284] sm:$0xff]
        %v385 = vld [vmem:[%s280 + $0x28c] sm:$0xff]
        %v386 = vld [vmem:[%s280 + $0x294] sm:$0xff]
        %v387 = vld [vmem:[%s280 + $0x29c] sm:$0xf]
        %v388 = vld [vmem:[%s280 + $0x2a0] sm:$0xff]
        %v389 = vld [vmem:[%s280 + $0x2a8] sm:$0xff]
        %v390 = vld [vmem:[%s280 + $0x2b0] sm:$0xff]
        %v391 = vld [vmem:[%s280 + $0x2b8] sm:$0xf]
        %v392 = vld [vmem:[%s280 + $0x2bc] sm:$0xff]
        %v393 = vld [vmem:[%s280 + $0x2c4] sm:$0xff]
        %v394 = vld [vmem:[%s280 + $0x2cc] sm:$0xff]
        %v395 = vld [vmem:[%s280 + $0x2d4] sm:$0xf]
        %v396 = vld [vmem:[%s280 + $0x2d8] sm:$0xff]
        %v397 = vld [vmem:[%s280 + $0x2e0] sm:$0xff]
        %v398 = vld [vmem:[%s280 + $0x2e8] sm:$0xff]
        %v399 = vld [vmem:[%s280 + $0x2f0] sm:$0xf]
        %v400 = vld [vmem:[%s280 + $0x2f4] sm:$0xff]
        %v401 = vld [vmem:[%s280 + $0x2fc] sm:$0xff]
        %v402 = vld [vmem:[%s280 + $0x304] sm:$0xff]
        %v403 = vld [vmem:[%s280 + $0x30c] sm:$0xf]
        %v404 = vld [vmem:[%s280 + $0x310] sm:$0xff]
        %v405 = vld [vmem:[%s280 + $0x318] sm:$0xff]
        %v406 = vld [vmem:[%s280 + $0x320] sm:$0xff]
        %v407 = vld [vmem:[%s280 + $0x328] sm:$0xf]
        %v408 = vld [vmem:[%s280 + $0x32c] sm:$0xff]
        %v409 = vld [vmem:[%s280 + $0x334] sm:$0xff]
        %v410 = vld [vmem:[%s280 + $0x33c] sm:$0xff]
        %v411 = vld [vmem:[%s280 + $0x344] sm:$0xf]
        %v412 = vld [vmem:[%s280 + $0x348] sm:$0xff]
        %v413 = vld [vmem:[%s280 + $0x350] sm:$0xff]
        %v414 = vld [vmem:[%s280 + $0x358] sm:$0xff]
        %v415 = vld [vmem:[%s280 + $0x360] sm:$0xf]
        %v416 = vld [vmem:[%s280 + $0x364] sm:$0xff]
        %v417 = vld [vmem:[%s280 + $0x36c] sm:$0xff]
        %v418 = vld [vmem:[%s280 + $0x374] sm:$0xff]
        %v419 = vld [vmem:[%s280 + $0x37c] sm:$0xf]
        %v420 = vld [vmem:[%s1] sm:$0xf]
        %v421 = vld [vmem:[%s1 + $0x4] sm:$0xf]
        %v422 = vld [vmem:[%s1 + $0x8] sm:$0xf]
        %v423 = vld [vmem:[%s1 + $0xc] sm:$0xf]
        %v424 = vld [vmem:[%s1 + $0x10] sm:$0xf]
        %v425 = vld [vmem:[%s1 + $0x14] sm:$0xf]
        %v426 = vld [vmem:[%s1 + $0x18] sm:$0xf]
        %v427 = vld [vmem:[%s1 + $0x1c] sm:$0xf]
        %v428 = vld [vmem:[%s1 + $0x20] sm:$0xf]
        %v429 = vld [vmem:[%s1 + $0x24] sm:$0xf]
        %v430 = vld [vmem:[%s1 + $0x28] sm:$0xf]
        %v431 = vld [vmem:[%s1 + $0x2c] sm:$0xf]
        %v432 = vld [vmem:[%s1 + $0x30] sm:$0xf]
        %v433 = vld [vmem:[%s1 + $0x34] sm:$0xf]
        %v434 = vld [vmem:[%s1 + $0x38] sm:$0xf]
        %v435 = vld [vmem:[%s1 + $0x3c] sm:$0xf]
        %v436 = vld [vmem:[%s1 + $0x40] sm:$0xf]
        %v437 = vld [vmem:[%s1 + $0x44] sm:$0xf]
        %v438 = vld [vmem:[%s1 + $0x48] sm:$0xf]
        %v439 = vld [vmem:[%s1 + $0x4c] sm:$0xf]
        %v440 = vld [vmem:[%s1 + $0x50] sm:$0xf]
        %v441 = vld [vmem:[%s1 + $0x54] sm:$0xf]
        %v442 = vld [vmem:[%s1 + $0x58] sm:$0xf]
        %v443 = vld [vmem:[%s1 + $0x5c] sm:$0xf]
        %v444 = vld [vmem:[%s1 + $0x60] sm:$0xf]
        %v445 = vld [vmem:[%s1 + $0x64] sm:$0xf]
        %v446 = vld [vmem:[%s1 + $0x68] sm:$0xf]
        %v447 = vld [vmem:[%s1 + $0x6c] sm:$0xf]
        %v448 = vld [vmem:[%s1 + $0x70] sm:$0xf]
        %v449 = vld [vmem:[%s1 + $0x74] sm:$0xf]
        %v450 = vld [vmem:[%s1 + $0x78] sm:$0xf]
        %v451 = vld [vmem:[%s1 + $0x7c] sm:$0xf]
        %v452 = vld [vmem:[%s1 + $0x80] sm:$0xf]
        %v453 = vld [vmem:[%s1 + $0x84] sm:$0xf]
        %v454 = vld [vmem:[%s1 + $0x88] sm:$0xf]
        %v455 = vld [vmem:[%s1 + $0x8c] sm:$0xf]
        %v456 = vld [vmem:[%s1 + $0x90] sm:$0xf]
        %v457 = vld [vmem:[%s1 + $0x94] sm:$0xf]
        %v458 = vld [vmem:[%s1 + $0x98] sm:$0xf]
        %v459 = vld [vmem:[%s1 + $0x9c] sm:$0xf]
        %v460 = vld [vmem:[%s1 + $0xa0] sm:$0xf]
        %v461 = vld [vmem:[%s1 + $0xa4] sm:$0xf]
        %v462 = vld [vmem:[%s1 + $0xa8] sm:$0xf]
        %v463 = vld [vmem:[%s1 + $0xac] sm:$0xf]
        %v464 = vld [vmem:[%s1 + $0xb0] sm:$0xf]
        %v465 = vld [vmem:[%s1 + $0xb4] sm:$0xf]
        %v466 = vld [vmem:[%s1 + $0xb8] sm:$0xf]
        %v467 = vld [vmem:[%s1 + $0xbc] sm:$0xf]
        %v468 = vld [vmem:[%s1 + $0xc0] sm:$0xf]
        %v469 = vld [vmem:[%s1 + $0xc4] sm:$0xf]
        %v470 = vld [vmem:[%s1 + $0xc8] sm:$0xf]
        %v471 = vld [vmem:[%s1 + $0xcc] sm:$0xf]
        %v472 = vld [vmem:[%s1 + $0xd0] sm:$0xf]
        %v473 = vld [vmem:[%s1 + $0xd4] sm:$0xf]
        %v474 = vld [vmem:[%s1 + $0xd8] sm:$0xf]
        %v475 = vld [vmem:[%s1 + $0xdc] sm:$0xf]
        %v476 = vld [vmem:[%s1 + $0xe0] sm:$0xf]
        %v477 = vld [vmem:[%s1 + $0xe4] sm:$0xf]
        %v478 = vld [vmem:[%s1 + $0xe8] sm:$0xf]
        %v479 = vld [vmem:[%s1 + $0xec] sm:$0xf]
        %v480 = vld [vmem:[%s1 + $0xf0] sm:$0xf]
        %v481 = vld [vmem:[%s1 + $0xf4] sm:$0xf]
        %v482 = vld [vmem:[%s1 + $0xf8] sm:$0xf]
        %v483 = vld [vmem:[%s1 + $0xfc] sm:$0xf]
        %v484 = vld [vmem:[%s1 + $0x100] sm:$0xf]
        %v485 = vld [vmem:[%s1 + $0x104] sm:$0xf]
        %v486 = vld [vmem:[%s1 + $0x108] sm:$0xf]
        %v487 = vld [vmem:[%s1 + $0x10c] sm:$0xf]
        %v488 = vld [vmem:[%s1 + $0x110] sm:$0xf]
        %v489 = vld [vmem:[%s1 + $0x114] sm:$0xf]
        %v490 = vld [vmem:[%s1 + $0x118] sm:$0xf]
        %v491 = vld [vmem:[%s1 + $0x11c] sm:$0xf]
        %v492 = vld [vmem:[%s1 + $0x120] sm:$0xf]
        %v493 = vld [vmem:[%s1 + $0x124] sm:$0xf]
        %v494 = vld [vmem:[%s1 + $0x128] sm:$0xf]
        %v495 = vld [vmem:[%s1 + $0x12c] sm:$0xf]
        %v496 = vld [vmem:[%s1 + $0x130] sm:$0xf]
        %v497 = vld [vmem:[%s1 + $0x134] sm:$0xf]
        %v498 = vld [vmem:[%s1 + $0x138] sm:$0xf]
        %v499 = vld [vmem:[%s1 + $0x13c] sm:$0xf]
        %v500 = vld [vmem:[%s1 + $0x140] sm:$0xf]
        %v501 = vld [vmem:[%s1 + $0x144] sm:$0xf]
        %v502 = vld [vmem:[%s1 + $0x148] sm:$0xf]
        %v503 = vld [vmem:[%s1 + $0x14c] sm:$0xf]
        %v504 = vld [vmem:[%s1 + $0x150] sm:$0xf]
        %v505 = vld [vmem:[%s1 + $0x154] sm:$0xf]
        %v506 = vld [vmem:[%s1 + $0x158] sm:$0xf]
        %v507 = vld [vmem:[%s1 + $0x15c] sm:$0xf]
        %v508 = vld [vmem:[%s1 + $0x160] sm:$0xf]
        %v509 = vld [vmem:[%s1 + $0x164] sm:$0xf]
        %v510 = vld [vmem:[%s1 + $0x168] sm:$0xf]
        %v511 = vld [vmem:[%s1 + $0x16c] sm:$0xf]
        %v512 = vld [vmem:[%s1 + $0x170] sm:$0xf]
        %v513 = vld [vmem:[%s1 + $0x174] sm:$0xf]
        %v514 = vld [vmem:[%s1 + $0x178] sm:$0xf]
        %v515 = vld [vmem:[%s1 + $0x17c] sm:$0xf]
        %v516 = vld [vmem:[%s1 + $0x180] sm:$0xf]
        %v517 = vld [vmem:[%s1 + $0x184] sm:$0xf]
        %v518 = vperm.slane %v284, 0
        %v647 = vunpack.c.l.b16 %v292
        %v648 = vunpack.c.h.b16 %v292
        %v649 = vunpack.c.l.b16 %v293
        %v650 = vunpack.c.h.b16 %v293
        %v651 = vunpack.c.l.b16 %v294
        %v652 = vunpack.c.h.b16 %v294
        %v653 = vunpack.c.l.b16 %v295
        %v654 = vunpack.c.l.b16 %v296
        %v655 = vunpack.c.h.b16 %v296
        %v656 = vunpack.c.l.b16 %v297
        %v657 = vunpack.c.h.b16 %v297
        %v658 = vunpack.c.l.b16 %v298
        %v659 = vunpack.c.h.b16 %v298
        %v660 = vunpack.c.l.b16 %v299
        %v661 = vunpack.c.l.b16 %v300
        %v662 = vunpack.c.h.b16 %v300
        %v663 = vunpack.c.l.b16 %v301
        %v664 = vunpack.c.h.b16 %v301
        %v665 = vunpack.c.l.b16 %v302
        %v666 = vunpack.c.h.b16 %v302
        %v667 = vunpack.c.l.b16 %v303
        %v668 = vunpack.c.l.b16 %v304
        %v669 = vunpack.c.h.b16 %v304
        %v670 = vunpack.c.l.b16 %v305
        %v671 = vunpack.c.h.b16 %v305
        %v672 = vunpack.c.l.b16 %v306
        %v673 = vunpack.c.h.b16 %v306
        %v674 = vunpack.c.l.b16 %v307
        %v675 = vunpack.c.l.b16 %v308
        %v676 = vunpack.c.h.b16 %v308
        %v677 = vunpack.c.l.b16 %v309
        %v678 = vunpack.c.h.b16 %v309
        %v679 = vunpack.c.l.b16 %v310
        %v680 = vunpack.c.h.b16 %v310
        %v681 = vunpack.c.l.b16 %v311
        %v682 = vunpack.c.l.b16 %v312
        %v683 = vunpack.c.h.b16 %v312
        %v684 = vunpack.c.l.b16 %v313
        %v685 = vunpack.c.h.b16 %v313
        %v686 = vunpack.c.l.b16 %v314
        %v687 = vunpack.c.h.b16 %v314
        %v688 = vunpack.c.l.b16 %v315
        %v689 = vunpack.c.l.b16 %v316
        %v690 = vunpack.c.h.b16 %v316
        %v691 = vunpack.c.l.b16 %v317
        %v692 = vunpack.c.h.b16 %v317
        %v693 = vunpack.c.l.b16 %v318
        %v694 = vunpack.c.h.b16 %v318
        %v695 = vunpack.c.l.b16 %v319
        %v696 = vunpack.c.l.b16 %v320
        %v697 = vunpack.c.h.b16 %v320
        %v698 = vunpack.c.l.b16 %v321
        %v699 = vunpack.c.h.b16 %v321
        %v700 = vunpack.c.l.b16 %v322
        %v701 = vunpack.c.h.b16 %v322
        %v702 = vunpack.c.l.b16 %v323
        %v703 = vunpack.c.l.b16 %v324
        %v704 = vunpack.c.h.b16 %v324
        %v705 = vunpack.c.l.b16 %v325
        %v706 = vunpack.c.h.b16 %v325
        %v707 = vunpack.c.l.b16 %v326
        %v708 = vunpack.c.h.b16 %v326
        %v709 = vunpack.c.l.b16 %v327
        %v710 = vunpack.c.l.b16 %v328
        %v711 = vunpack.c.h.b16 %v328
        %v712 = vunpack.c.l.b16 %v329
        %v713 = vunpack.c.h.b16 %v329
        %v714 = vunpack.c.l.b16 %v330
        %v715 = vunpack.c.h.b16 %v330
        %v716 = vunpack.c.l.b16 %v331
        %v717 = vunpack.c.l.b16 %v332
        %v718 = vunpack.c.h.b16 %v332
        %v719 = vunpack.c.l.b16 %v333
        %v720 = vunpack.c.h.b16 %v333
        %v721 = vunpack.c.l.b16 %v334
        %v722 = vunpack.c.h.b16 %v334
        %v723 = vunpack.c.l.b16 %v335
        %v724 = vunpack.c.l.b16 %v336
        %v725 = vunpack.c.h.b16 %v336
        %v726 = vunpack.c.l.b16 %v337
        %v727 = vunpack.c.h.b16 %v337
        %v728 = vunpack.c.l.b16 %v338
        %v729 = vunpack.c.h.b16 %v338
        %v730 = vunpack.c.l.b16 %v339
        %v731 = vunpack.c.l.b16 %v340
        %v732 = vunpack.c.h.b16 %v340
        %v733 = vunpack.c.l.b16 %v341
        %v734 = vunpack.c.h.b16 %v341
        %v735 = vunpack.c.l.b16 %v342
        %v736 = vunpack.c.h.b16 %v342
        %v737 = vunpack.c.l.b16 %v343
        %v738 = vunpack.c.l.b16 %v344
        %v739 = vunpack.c.h.b16 %v344
        %v740 = vunpack.c.l.b16 %v345
        %v741 = vunpack.c.h.b16 %v345
        %v742 = vunpack.c.l.b16 %v346
        %v743 = vunpack.c.h.b16 %v346
        %v744 = vunpack.c.l.b16 %v347
        %v745 = vunpack.c.l.b16 %v348
        %v746 = vunpack.c.h.b16 %v348
        %v747 = vunpack.c.l.b16 %v349
        %v748 = vunpack.c.h.b16 %v349
        %v749 = vunpack.c.l.b16 %v350
        %v750 = vunpack.c.h.b16 %v350
        %v751 = vunpack.c.l.b16 %v351
        %v752 = vunpack.c.l.b16 %v352
        %v753 = vunpack.c.h.b16 %v352
        %v754 = vunpack.c.l.b16 %v353
        %v755 = vunpack.c.h.b16 %v353
        %v756 = vunpack.c.l.b16 %v354
        %v757 = vunpack.c.h.b16 %v354
        %v758 = vunpack.c.l.b16 %v355
        %v759 = vunpack.c.l.b16 %v356
        %v760 = vunpack.c.h.b16 %v356
        %v761 = vunpack.c.l.b16 %v357
        %v762 = vunpack.c.h.b16 %v357
        %v763 = vunpack.c.l.b16 %v358
        %v764 = vunpack.c.h.b16 %v358
        %v765 = vunpack.c.l.b16 %v359
        %v766 = vunpack.c.l.b16 %v360
        %v767 = vunpack.c.h.b16 %v360
        %v768 = vunpack.c.l.b16 %v361
        %v769 = vunpack.c.h.b16 %v361
        %v770 = vunpack.c.l.b16 %v362
        %v771 = vunpack.c.h.b16 %v362
        %v772 = vunpack.c.l.b16 %v363
        %v773 = vunpack.c.l.b16 %v364
        %v774 = vunpack.c.h.b16 %v364
        %v775 = vunpack.c.l.b16 %v365
        %v776 = vunpack.c.h.b16 %v365
        %v777 = vunpack.c.l.b16 %v366
        %v778 = vunpack.c.h.b16 %v366
        %v779 = vunpack.c.l.b16 %v367
        %v780 = vunpack.c.l.b16 %v368
        %v781 = vunpack.c.h.b16 %v368
        %v782 = vunpack.c.l.b16 %v369
        %v783 = vunpack.c.h.b16 %v369
        %v784 = vunpack.c.l.b16 %v370
        %v785 = vunpack.c.h.b16 %v370
        %v786 = vunpack.c.l.b16 %v371
        %v787 = vunpack.c.l.b16 %v372
        %v788 = vunpack.c.h.b16 %v372
        %v789 = vunpack.c.l.b16 %v373
        %v790 = vunpack.c.h.b16 %v373
        %v791 = vunpack.c.l.b16 %v374
        %v792 = vunpack.c.h.b16 %v374
        %v793 = vunpack.c.l.b16 %v375
        %v794 = vunpack.c.l.b16 %v376
        %v795 = vunpack.c.h.b16 %v376
        %v796 = vunpack.c.l.b16 %v377
        %v797 = vunpack.c.h.b16 %v377
        %v798 = vunpack.c.l.b16 %v378
        %v799 = vunpack.c.h.b16 %v378
        %v800 = vunpack.c.l.b16 %v379
        %v801 = vunpack.c.l.b16 %v380
        %v802 = vunpack.c.h.b16 %v380
        %v803 = vunpack.c.l.b16 %v381
        %v804 = vunpack.c.h.b16 %v381
        %v805 = vunpack.c.l.b16 %v382
        %v806 = vunpack.c.h.b16 %v382
        %v807 = vunpack.c.l.b16 %v383
        %v808 = vunpack.c.l.b16 %v384
        %v809 = vunpack.c.h.b16 %v384
        %v810 = vunpack.c.l.b16 %v385
        %v811 = vunpack.c.h.b16 %v385
        %v812 = vunpack.c.l.b16 %v386
        %v813 = vunpack.c.h.b16 %v386
        %v814 = vunpack.c.l.b16 %v387
        %v815 = vunpack.c.l.b16 %v388
        %v816 = vunpack.c.h.b16 %v388
        %v817 = vunpack.c.l.b16 %v389
        %v818 = vunpack.c.h.b16 %v389
        %v819 = vunpack.c.l.b16 %v390
        %v820 = vunpack.c.h.b16 %v390
        %v821 = vunpack.c.l.b16 %v391
        %v822 = vunpack.c.l.b16 %v392
        %v823 = vunpack.c.h.b16 %v392
        %v824 = vunpack.c.l.b16 %v393
        %v825 = vunpack.c.h.b16 %v393
        %v826 = vunpack.c.l.b16 %v394
        %v827 = vunpack.c.h.b16 %v394
        %v828 = vunpack.c.l.b16 %v395
        %v829 = vunpack.c.l.b16 %v396
        %v830 = vunpack.c.h.b16 %v396
        %v831 = vunpack.c.l.b16 %v397
        %v832 = vunpack.c.h.b16 %v397
        %v833 = vunpack.c.l.b16 %v398
        %v834 = vunpack.c.h.b16 %v398
        %v835 = vunpack.c.l.b16 %v399
        %v836 = vunpack.c.l.b16 %v400
        %v837 = vunpack.c.h.b16 %v400
        %v838 = vunpack.c.l.b16 %v401
        %v839 = vunpack.c.h.b16 %v401
        %v840 = vunpack.c.l.b16 %v402
        %v841 = vunpack.c.h.b16 %v402
        %v842 = vunpack.c.l.b16 %v403
        %v843 = vunpack.c.l.b16 %v404
        %v844 = vunpack.c.h.b16 %v404
        %v845 = vunpack.c.l.b16 %v405
        %v846 = vunpack.c.h.b16 %v405
        %v847 = vunpack.c.l.b16 %v406
        %v848 = vunpack.c.h.b16 %v406
        %v849 = vunpack.c.l.b16 %v407
        %v850 = vunpack.c.l.b16 %v408
        %v851 = vunpack.c.h.b16 %v408
        %v852 = vunpack.c.l.b16 %v409
        %v853 = vunpack.c.h.b16 %v409
        %v854 = vunpack.c.l.b16 %v410
        %v855 = vunpack.c.h.b16 %v410
        %v856 = vunpack.c.l.b16 %v411
        %v857 = vunpack.c.l.b16 %v412
        %v858 = vunpack.c.h.b16 %v412
        %v859 = vunpack.c.l.b16 %v413
        %v860 = vunpack.c.h.b16 %v413
        %v861 = vunpack.c.l.b16 %v414
        %v862 = vunpack.c.h.b16 %v414
        %v863 = vunpack.c.l.b16 %v415
        %v864 = vunpack.c.l.b16 %v416
        %v865 = vunpack.c.h.b16 %v416
        %v866 = vunpack.c.l.b16 %v417
        %v867 = vunpack.c.h.b16 %v417
        %v868 = vunpack.c.l.b16 %v418
        %v869 = vunpack.c.h.b16 %v418
        %v870 = vunpack.c.l.b16 %v419
        %v871 = vpack.c.b16 %v654, %v647
        %v872 = vpack.c.b16 %v655, %v648
        %v873 = vpack.c.b16 %v656, %v649
        %v874 = vpack.c.b16 %v657, %v650
        %v875 = vpack.c.b16 %v658, %v651
        %v876 = vpack.c.b16 %v659, %v652
        %v877 = vpack.c.b16 %v660, %v653
        %v878 = vpack.c.b16 %v668, %v661
        %v879 = vpack.c.b16 %v669, %v662
        %v880 = vpack.c.b16 %v670, %v663
        %v881 = vpack.c.b16 %v671, %v664
        %v882 = vpack.c.b16 %v672, %v665
        %v883 = vpack.c.b16 %v673, %v666
        %v884 = vpack.c.b16 %v674, %v667
        %v885 = vpack.c.b16 %v682, %v675
        %v886 = vpack.c.b16 %v683, %v676
        %v887 = vpack.c.b16 %v684, %v677
        %v888 = vpack.c.b16 %v685, %v678
        %v889 = vpack.c.b16 %v686, %v679
        %v890 = vpack.c.b16 %v687, %v680
        %v891 = vpack.c.b16 %v688, %v681
        %v892 = vpack.c.b16 %v696, %v689
        %v893 = vpack.c.b16 %v697, %v690
        %v894 = vpack.c.b16 %v698, %v691
        %v895 = vpack.c.b16 %v699, %v692
        %v896 = vpack.c.b16 %v700, %v693
        %v897 = vpack.c.b16 %v701, %v694
        %v898 = vpack.c.b16 %v702, %v695
        %v899 = vpack.c.b16 %v710, %v703
        %v900 = vpack.c.b16 %v711, %v704
        %v901 = vpack.c.b16 %v712, %v705
        %v902 = vpack.c.b16 %v713, %v706
        %v903 = vpack.c.b16 %v714, %v707
        %v904 = vpack.c.b16 %v715, %v708
        %v905 = vpack.c.b16 %v716, %v709
        %v906 = vpack.c.b16 %v724, %v717
        %v907 = vpack.c.b16 %v725, %v718
        %v908 = vpack.c.b16 %v726, %v719
        %v909 = vpack.c.b16 %v727, %v720
        %v910 = vpack.c.b16 %v728, %v721
        %v911 = vpack.c.b16 %v729, %v722
        %v912 = vpack.c.b16 %v730, %v723
        %v913 = vpack.c.b16 %v738, %v731
        %v914 = vpack.c.b16 %v739, %v732
        %v915 = vpack.c.b16 %v740, %v733
        %v916 = vpack.c.b16 %v741, %v734
        %v917 = vpack.c.b16 %v742, %v735
        %v918 = vpack.c.b16 %v743, %v736
        %v919 = vpack.c.b16 %v744, %v737
        %v920 = vpack.c.b16 %v752, %v745
        %v921 = vpack.c.b16 %v753, %v746
        %v922 = vpack.c.b16 %v754, %v747
        %v923 = vpack.c.b16 %v755, %v748
        %v924 = vpack.c.b16 %v756, %v749
        %v925 = vpack.c.b16 %v757, %v750
        %v926 = vpack.c.b16 %v758, %v751
        %v927 = vpack.c.b16 %v766, %v759
        %v928 = vpack.c.b16 %v767, %v760
        %v929 = vpack.c.b16 %v768, %v761
        %v930 = vpack.c.b16 %v769, %v762
        %v931 = vpack.c.b16 %v770, %v763
        %v932 = vpack.c.b16 %v771, %v764
        %v933 = vpack.c.b16 %v772, %v765
        %v934 = vpack.c.b16 %v780, %v773
        %v935 = vpack.c.b16 %v781, %v774
        %v936 = vpack.c.b16 %v782, %v775
        %v937 = vpack.c.b16 %v783, %v776
        %v938 = vpack.c.b16 %v784, %v777
        %v939 = vpack.c.b16 %v785, %v778
        %v940 = vpack.c.b16 %v786, %v779
        %v941 = vpack.c.b16 %v794, %v787
        %v942 = vpack.c.b16 %v795, %v788
        %v943 = vpack.c.b16 %v796, %v789
        %v944 = vpack.c.b16 %v797, %v790
        %v945 = vpack.c.b16 %v798, %v791
        %v946 = vpack.c.b16 %v799, %v792
        %v947 = vpack.c.b16 %v800, %v793
        %v948 = vpack.c.b16 %v808, %v801
        %v949 = vpack.c.b16 %v809, %v802
        %v950 = vpack.c.b16 %v810, %v803
        %v951 = vpack.c.b16 %v811, %v804
        %v952 = vpack.c.b16 %v812, %v805
        %v953 = vpack.c.b16 %v813, %v806
        %v954 = vpack.c.b16 %v814, %v807
        %v955 = vpack.c.b16 %v822, %v815
        %v956 = vpack.c.b16 %v823, %v816
        %v957 = vpack.c.b16 %v824, %v817
        %v958 = vpack.c.b16 %v825, %v818
        %v959 = vpack.c.b16 %v826, %v819
        %v960 = vpack.c.b16 %v827, %v820
        %v961 = vpack.c.b16 %v828, %v821
        %v962 = vpack.c.b16 %v836, %v829
        %v963 = vpack.c.b16 %v837, %v830
        %v964 = vpack.c.b16 %v838, %v831
        %v965 = vpack.c.b16 %v839, %v832
        %v966 = vpack.c.b16 %v840, %v833
        %v967 = vpack.c.b16 %v841, %v834
        %v968 = vpack.c.b16 %v842, %v835
        %v969 = vpack.c.b16 %v850, %v843
        %v970 = vpack.c.b16 %v851, %v844
        %v971 = vpack.c.b16 %v852, %v845
        %v972 = vpack.c.b16 %v853, %v846
        %v973 = vpack.c.b16 %v854, %v847
        %v974 = vpack.c.b16 %v855, %v848
        %v975 = vpack.c.b16 %v856, %v849
        %v976 = vpack.c.b16 %v864, %v857
        %v977 = vpack.c.b16 %v865, %v858
        %v978 = vpack.c.b16 %v866, %v859
        %v979 = vpack.c.b16 %v867, %v860
        %v980 = vpack.c.b16 %v868, %v861
        %v981 = vpack.c.b16 %v869, %v862
        %v982 = vpack.c.b16 %v870, %v863
        %v1177 = vunpack.c.l.b16 %v420
        %v1178 = vunpack.c.l.b16 %v421
        %v1179 = vunpack.c.l.b16 %v422
        %v1180 = vunpack.c.l.b16 %v423
        %v1181 = vunpack.c.l.b16 %v424
        %v1182 = vunpack.c.l.b16 %v425
        %v1183 = vunpack.c.l.b16 %v426
        %v1184 = vunpack.c.l.b16 %v427
        %v1185 = vunpack.c.l.b16 %v428
        %v1186 = vunpack.c.l.b16 %v429
        %v1187 = vunpack.c.l.b16 %v430
        %v1188 = vunpack.c.l.b16 %v431
        %v1189 = vunpack.c.l.b16 %v432
        %v1190 = vunpack.c.l.b16 %v433
        %v1191 = vunpack.c.l.b16 %v434
        %v1192 = vunpack.c.l.b16 %v435
        %v1193 = vunpack.c.l.b16 %v436
        %v1194 = vunpack.c.l.b16 %v437
        %v1195 = vunpack.c.l.b16 %v438
        %v1196 = vunpack.c.l.b16 %v439
        %v1197 = vunpack.c.l.b16 %v440
        %v1198 = vunpack.c.l.b16 %v441
        %v1199 = vunpack.c.l.b16 %v442
        %v1200 = vunpack.c.l.b16 %v443
        %v1201 = vunpack.c.l.b16 %v444
        %v1202 = vunpack.c.l.b16 %v445
        %v1203 = vunpack.c.l.b16 %v446
        %v1204 = vunpack.c.l.b16 %v447
        %v1205 = vunpack.c.l.b16 %v448
        %v1206 = vunpack.c.l.b16 %v449
        %v1207 = vunpack.c.l.b16 %v450
        %v1208 = vunpack.c.l.b16 %v451
        %v1209 = vunpack.c.l.b16 %v452
        %v1210 = vunpack.c.l.b16 %v453
        %v1211 = vunpack.c.l.b16 %v454
        %v1212 = vunpack.c.l.b16 %v455
        %v1213 = vunpack.c.l.b16 %v456
        %v1214 = vunpack.c.l.b16 %v457
        %v1215 = vunpack.c.l.b16 %v458
        %v1216 = vunpack.c.l.b16 %v459
        %v1217 = vunpack.c.l.b16 %v460
        %v1218 = vunpack.c.l.b16 %v461
        %v1219 = vunpack.c.l.b16 %v462
        %v1220 = vunpack.c.l.b16 %v463
        %v1221 = vunpack.c.l.b16 %v464
        %v1222 = vunpack.c.l.b16 %v465
        %v1223 = vunpack.c.l.b16 %v466
        %v1224 = vunpack.c.l.b16 %v467
        %v1225 = vunpack.c.l.b16 %v468
        %v1226 = vunpack.c.l.b16 %v469
        %v1227 = vunpack.c.l.b16 %v470
        %v1228 = vunpack.c.l.b16 %v471
        %v1229 = vunpack.c.l.b16 %v472
        %v1230 = vunpack.c.l.b16 %v473
        %v1231 = vunpack.c.l.b16 %v474
        %v1232 = vunpack.c.l.b16 %v475
        %v1233 = vunpack.c.l.b16 %v476
        %v1234 = vunpack.c.l.b16 %v477
        %v1235 = vunpack.c.l.b16 %v478
        %v1236 = vunpack.c.l.b16 %v479
        %v1237 = vunpack.c.l.b16 %v480
        %v1238 = vunpack.c.l.b16 %v481
        %v1239 = vunpack.c.l.b16 %v482
        %v1240 = vunpack.c.l.b16 %v483
        %v1241 = vunpack.c.l.b16 %v484
        %v1242 = vunpack.c.l.b16 %v485
        %v1243 = vunpack.c.l.b16 %v486
        %v1244 = vunpack.c.l.b16 %v487
        %v1245 = vunpack.c.l.b16 %v488
        %v1246 = vunpack.c.l.b16 %v489
        %v1247 = vunpack.c.l.b16 %v490
        %v1248 = vunpack.c.l.b16 %v491
        %v1249 = vunpack.c.l.b16 %v492
        %v1250 = vunpack.c.l.b16 %v493
        %v1251 = vunpack.c.l.b16 %v494
        %v1252 = vunpack.c.l.b16 %v495
        %v1253 = vunpack.c.l.b16 %v496
        %v1254 = vunpack.c.l.b16 %v497
        %v1255 = vunpack.c.l.b16 %v498
        %v1256 = vunpack.c.l.b16 %v499
        %v1257 = vunpack.c.l.b16 %v500
        %v1258 = vunpack.c.l.b16 %v501
        %v1259 = vunpack.c.l.b16 %v502
        %v1260 = vunpack.c.l.b16 %v503
        %v1261 = vunpack.c.l.b16 %v504
        %v1262 = vunpack.c.l.b16 %v505
        %v1263 = vunpack.c.l.b16 %v506
        %v1264 = vunpack.c.l.b16 %v507
        %v1265 = vunpack.c.l.b16 %v508
        %v1266 = vunpack.c.l.b16 %v509
        %v1267 = vunpack.c.l.b16 %v510
        %v1268 = vunpack.c.l.b16 %v511
        %v1269 = vunpack.c.l.b16 %v512
        %v1270 = vunpack.c.l.b16 %v513
        %v1271 = vunpack.c.l.b16 %v514
        %v1272 = vunpack.c.l.b16 %v515
        %v1273 = vunpack.c.l.b16 %v516
        %v1274 = vunpack.c.l.b16 %v517
        %v1275 = vpack.c.b16 %v1178, %v1177
        %v1276 = vpack.c.b16 %v1180, %v1179
        %v1277 = vpack.c.b16 %v1182, %v1181
        %v1278 = vpack.c.b16 %v1184, %v1183
        %v1279 = vpack.c.b16 %v1186, %v1185
        %v1280 = vpack.c.b16 %v1188, %v1187
        %v1281 = vpack.c.b16 %v1190, %v1189
        %v1282 = vpack.c.b16 %v1192, %v1191
        %v1283 = vpack.c.b16 %v1194, %v1193
        %v1284 = vpack.c.b16 %v1196, %v1195
        %v1285 = vpack.c.b16 %v1198, %v1197
        %v1286 = vpack.c.b16 %v1200, %v1199
        %v1287 = vpack.c.b16 %v1202, %v1201
        %v1288 = vpack.c.b16 %v1204, %v1203
        %v1289 = vpack.c.b16 %v1206, %v1205
        %v1290 = vpack.c.b16 %v1208, %v1207
        %v1291 = vpack.c.b16 %v1210, %v1209
        %v1292 = vpack.c.b16 %v1212, %v1211
        %v1293 = vpack.c.b16 %v1214, %v1213
        %v1294 = vpack.c.b16 %v1216, %v1215
        %v1295 = vpack.c.b16 %v1218, %v1217
        %v1296 = vpack.c.b16 %v1220, %v1219
        %v1297 = vpack.c.b16 %v1222, %v1221
        %v1298 = vpack.c.b16 %v1224, %v1223
        %v1299 = vpack.c.b16 %v1226, %v1225
        %v1300 = vpack.c.b16 %v1228, %v1227
        %v1301 = vpack.c.b16 %v1230, %v1229
        %v1302 = vpack.c.b16 %v1232, %v1231
        %v1303 = vpack.c.b16 %v1234, %v1233
        %v1304 = vpack.c.b16 %v1236, %v1235
        %v1305 = vpack.c.b16 %v1238, %v1237
        %v1306 = vpack.c.b16 %v1240, %v1239
        %v1307 = vpack.c.b16 %v1242, %v1241
        %v1308 = vpack.c.b16 %v1244, %v1243
        %v1309 = vpack.c.b16 %v1246, %v1245
        %v1310 = vpack.c.b16 %v1248, %v1247
        %v1311 = vpack.c.b16 %v1250, %v1249
        %v1312 = vpack.c.b16 %v1252, %v1251
        %v1313 = vpack.c.b16 %v1254, %v1253
        %v1314 = vpack.c.b16 %v1256, %v1255
        %v1315 = vpack.c.b16 %v1258, %v1257
        %v1316 = vpack.c.b16 %v1260, %v1259
        %v1317 = vpack.c.b16 %v1262, %v1261
        %v1318 = vpack.c.b16 %v1264, %v1263
        %v1319 = vpack.c.b16 %v1266, %v1265
        %v1320 = vpack.c.b16 %v1268, %v1267
        %v1321 = vpack.c.b16 %v1270, %v1269
        %v1322 = vpack.c.b16 %v1272, %v1271
        %v1323 = vpack.c.b16 %v1274, %v1273
        %vm1373 = vcmask 130048
        %v1375 = vsel %vm1373, %v877, 0
        %v1378 = vsel %vm1373, %v884, 0
        %v1381 = vsel %vm1373, %v891, 0
        %v1384 = vsel %vm1373, %v898, 0
        %v1387 = vsel %vm1373, %v905, 0
        %v1390 = vsel %vm1373, %v912, 0
        %v1393 = vsel %vm1373, %v919, 0
        %v1396 = vsel %vm1373, %v926, 0
        %v1399 = vsel %vm1373, %v933, 0
        %v1402 = vsel %vm1373, %v940, 0
        %v1405 = vsel %vm1373, %v947, 0
        %v1408 = vsel %vm1373, %v954, 0
        %v1411 = vsel %vm1373, %v961, 0
        %v1414 = vsel %vm1373, %v968, 0
        %v1417 = vsel %vm1373, %v975, 0
        %v1420 = vsel %vm1373, %v982, 0
        %1422 = vmatpush.bf16.msra.mxu0 %v1282
        %1423 = vmatpush.bf16.msra.mxu0 %v1281
        %1424 = vmatpush.bf16.msra.mxu0 %v1280
        %1425 = vmatpush.bf16.msra.mxu0 %v1279
        %1426 = vmatpush.bf16.msra.mxu0 %v1278
        %1427 = vmatpush.bf16.msra.mxu0 %v1277
        %1428 = vmatpush.bf16.msra.mxu0 %v1276
        %1429 = vmatpush.bf16.msra.mxu0 %v1275
        %1430 = vmatmul.bf16.gmra.mxu0 %v871
        %v1431 = vpop.f32.mrf.mxu0
        %v1432 = vadd.f32 %v518, %v1431
        %v1433 = vpop.f32.mrf.mxu0
        %v1434 = vadd.f32 %v518, %v1433
        %1435 = vmatmul.bf16.gmra.mxu0 %v878
        %v1436 = vpop.f32.mrf.mxu0
        %v1437 = vadd.f32 %v518, %v1436
        %v1438 = vpop.f32.mrf.mxu0
        %v1439 = vadd.f32 %v518, %v1438
        %1440 = vmatmul.bf16.gmra.mxu0 %v885
        %v1441 = vpop.f32.mrf.mxu0
        %v1442 = vadd.f32 %v518, %v1441
        %v1443 = vpop.f32.mrf.mxu0
        %v1444 = vadd.f32 %v518, %v1443
        %1445 = vmatmul.bf16.gmra.mxu0 %v892
        %v1446 = vpop.f32.mrf.mxu0
        %v1447 = vadd.f32 %v518, %v1446
        %v1448 = vpop.f32.mrf.mxu0
        %v1449 = vadd.f32 %v518, %v1448
        %1450 = vmatmul.bf16.gmra.mxu0 %v899
        %v1451 = vpop.f32.mrf.mxu0
        %v1452 = vadd.f32 %v518, %v1451
        %v1453 = vpop.f32.mrf.mxu0
        %v1454 = vadd.f32 %v518, %v1453
        %1455 = vmatmul.bf16.gmra.mxu0 %v906
        %v1456 = vpop.f32.mrf.mxu0
        %v1457 = vadd.f32 %v518, %v1456
        %v1458 = vpop.f32.mrf.mxu0
        %v1459 = vadd.f32 %v518, %v1458
        %1460 = vmatmul.bf16.gmra.mxu0 %v913
        %v1461 = vpop.f32.mrf.mxu0
        %v1462 = vadd.f32 %v518, %v1461
        %v1463 = vpop.f32.mrf.mxu0
        %v1464 = vadd.f32 %v518, %v1463
        %1465 = vmatmul.bf16.gmra.mxu0 %v920
        %v1466 = vpop.f32.mrf.mxu0
        %v1467 = vadd.f32 %v518, %v1466
        %v1468 = vpop.f32.mrf.mxu0
        %v1469 = vadd.f32 %v518, %v1468
        %1470 = vmatmul.bf16.gmra.mxu0 %v927
        %v1471 = vpop.f32.mrf.mxu0
        %v1472 = vadd.f32 %v518, %v1471
        %v1473 = vpop.f32.mrf.mxu0
        %v1474 = vadd.f32 %v518, %v1473
        %1475 = vmatmul.bf16.gmra.mxu0 %v934
        %v1476 = vpop.f32.mrf.mxu0
        %v1477 = vadd.f32 %v518, %v1476
        %v1478 = vpop.f32.mrf.mxu0
        %v1479 = vadd.f32 %v518, %v1478
        %1480 = vmatmul.bf16.gmra.mxu0 %v941
        %v1481 = vpop.f32.mrf.mxu0
        %v1482 = vadd.f32 %v518, %v1481
        %v1483 = vpop.f32.mrf.mxu0
        %v1484 = vadd.f32 %v518, %v1483
        %1485 = vmatmul.bf16.gmra.mxu0 %v948
        %v1486 = vpop.f32.mrf.mxu0
        %v1487 = vadd.f32 %v518, %v1486
        %v1488 = vpop.f32.mrf.mxu0
        %v1489 = vadd.f32 %v518, %v1488
        %1490 = vmatmul.bf16.gmra.mxu0 %v955
        %v1491 = vpop.f32.mrf.mxu0
        %v1492 = vadd.f32 %v518, %v1491
        %v1493 = vpop.f32.mrf.mxu0
        %v1494 = vadd.f32 %v518, %v1493
        %1495 = vmatmul.bf16.gmra.mxu0 %v962
        %v1496 = vpop.f32.mrf.mxu0
        %v1497 = vadd.f32 %v518, %v1496
        %v1498 = vpop.f32.mrf.mxu0
        %v1499 = vadd.f32 %v518, %v1498
        %1500 = vmatmul.bf16.gmra.mxu0 %v969
        %v1501 = vpop.f32.mrf.mxu0
        %v1502 = vadd.f32 %v518, %v1501
        %v1503 = vpop.f32.mrf.mxu0
        %v1504 = vadd.f32 %v518, %v1503
        %1505 = vmatmul.bf16.gmra.mxu0 %v976
        %v1506 = vpop.f32.mrf.mxu0
        %v1507 = vadd.f32 %v518, %v1506
        %v1508 = vpop.f32.mrf.mxu0
        %v1509 = vadd.f32 %v518, %v1508
        %1510 = vdwg.mxu0
        %1511 = vmatpush.bf16.msra.mxu0 %v1290
        %1512 = vmatpush.bf16.msra.mxu0 %v1289
        %1513 = vmatpush.bf16.msra.mxu0 %v1288
        %1514 = vmatpush.bf16.msra.mxu0 %v1287
        %1515 = vmatpush.bf16.msra.mxu0 %v1286
        %1516 = vmatpush.bf16.msra.mxu0 %v1285
        %1517 = vmatpush.bf16.msra.mxu0 %v1284
        %1518 = vmatpush.bf16.msra.mxu0 %v1283
        %1519 = vmatmul.bf16.gmra.mxu0 %v872
        %v1520 = vpop.f32.mrf.mxu0
        %v1521 = vadd.f32 %v1432, %v1520
        %v1522 = vpop.f32.mrf.mxu0
        %v1523 = vadd.f32 %v1434, %v1522
        %1524 = vmatmul.bf16.gmra.mxu0 %v879
        %v1525 = vpop.f32.mrf.mxu0
        %v1526 = vadd.f32 %v1437, %v1525
        %v1527 = vpop.f32.mrf.mxu0
        %v1528 = vadd.f32 %v1439, %v1527
        %1529 = vmatmul.bf16.gmra.mxu0 %v886
        %v1530 = vpop.f32.mrf.mxu0
        %v1531 = vadd.f32 %v1442, %v1530
        %v1532 = vpop.f32.mrf.mxu0
        %v1533 = vadd.f32 %v1444, %v1532
        %1534 = vmatmul.bf16.gmra.mxu0 %v893
        %v1535 = vpop.f32.mrf.mxu0
        %v1536 = vadd.f32 %v1447, %v1535
        %v1537 = vpop.f32.mrf.mxu0
        %v1538 = vadd.f32 %v1449, %v1537
        %1539 = vmatmul.bf16.gmra.mxu0 %v900
        %v1540 = vpop.f32.mrf.mxu0
        %v1541 = vadd.f32 %v1452, %v1540
        %v1542 = vpop.f32.mrf.mxu0
        %v1543 = vadd.f32 %v1454, %v1542
        %1544 = vmatmul.bf16.gmra.mxu0 %v907
        %v1545 = vpop.f32.mrf.mxu0
        %v1546 = vadd.f32 %v1457, %v1545
        %v1547 = vpop.f32.mrf.mxu0
        %v1548 = vadd.f32 %v1459, %v1547
        %1549 = vmatmul.bf16.gmra.mxu0 %v914
        %v1550 = vpop.f32.mrf.mxu0
        %v1551 = vadd.f32 %v1462, %v1550
        %v1552 = vpop.f32.mrf.mxu0
        %v1553 = vadd.f32 %v1464, %v1552
        %1554 = vmatmul.bf16.gmra.mxu0 %v921
        %v1555 = vpop.f32.mrf.mxu0
        %v1556 = vadd.f32 %v1467, %v1555
        %v1557 = vpop.f32.mrf.mxu0
        %v1558 = vadd.f32 %v1469, %v1557
        %1559 = vmatmul.bf16.gmra.mxu0 %v928
        %v1560 = vpop.f32.mrf.mxu0
        %v1561 = vadd.f32 %v1472, %v1560
        %v1562 = vpop.f32.mrf.mxu0
        %v1563 = vadd.f32 %v1474, %v1562
        %1564 = vmatmul.bf16.gmra.mxu0 %v935
        %v1565 = vpop.f32.mrf.mxu0
        %v1566 = vadd.f32 %v1477, %v1565
        %v1567 = vpop.f32.mrf.mxu0
        %v1568 = vadd.f32 %v1479, %v1567
        %1569 = vmatmul.bf16.gmra.mxu0 %v942
        %v1570 = vpop.f32.mrf.mxu0
        %v1571 = vadd.f32 %v1482, %v1570
        %v1572 = vpop.f32.mrf.mxu0
        %v1573 = vadd.f32 %v1484, %v1572
        %1574 = vmatmul.bf16.gmra.mxu0 %v949
        %v1575 = vpop.f32.mrf.mxu0
        %v1576 = vadd.f32 %v1487, %v1575
        %v1577 = vpop.f32.mrf.mxu0
        %v1578 = vadd.f32 %v1489, %v1577
        %1579 = vmatmul.bf16.gmra.mxu0 %v956
        %v1580 = vpop.f32.mrf.mxu0
        %v1581 = vadd.f32 %v1492, %v1580
        %v1582 = vpop.f32.mrf.mxu0
        %v1583 = vadd.f32 %v1494, %v1582
        %1584 = vmatmul.bf16.gmra.mxu0 %v963
        %v1585 = vpop.f32.mrf.mxu0
        %v1586 = vadd.f32 %v1497, %v1585
        %v1587 = vpop.f32.mrf.mxu0
        %v1588 = vadd.f32 %v1499, %v1587
        %1589 = vmatmul.bf16.gmra.mxu0 %v970
        %v1590 = vpop.f32.mrf.mxu0
        %v1591 = vadd.f32 %v1502, %v1590
        %v1592 = vpop.f32.mrf.mxu0
        %v1593 = vadd.f32 %v1504, %v1592
        %1594 = vmatmul.bf16.gmra.mxu0 %v977
        %v1595 = vpop.f32.mrf.mxu0
        %v1596 = vadd.f32 %v1507, %v1595
        %v1597 = vpop.f32.mrf.mxu0
        %v1598 = vadd.f32 %v1509, %v1597
        %1599 = vdwg.mxu0
        %1600 = vmatpush.bf16.msra.mxu0 %v1298
        %1601 = vmatpush.bf16.msra.mxu0 %v1297
        %1602 = vmatpush.bf16.msra.mxu0 %v1296
        %1603 = vmatpush.bf16.msra.mxu0 %v1295
        %1604 = vmatpush.bf16.msra.mxu0 %v1294
        %1605 = vmatpush.bf16.msra.mxu0 %v1293
        %1606 = vmatpush.bf16.msra.mxu0 %v1292
        %1607 = vmatpush.bf16.msra.mxu0 %v1291
        %1608 = vmatmul.bf16.gmra.mxu0 %v873
        %v1609 = vpop.f32.mrf.mxu0
        %v1610 = vadd.f32 %v1521, %v1609
        %v1611 = vpop.f32.mrf.mxu0
        %v1612 = vadd.f32 %v1523, %v1611
        %1613 = vmatmul.bf16.gmra.mxu0 %v880
        %v1614 = vpop.f32.mrf.mxu0
        %v1615 = vadd.f32 %v1526, %v1614
        %v1616 = vpop.f32.mrf.mxu0
        %v1617 = vadd.f32 %v1528, %v1616
        %1618 = vmatmul.bf16.gmra.mxu0 %v887
        %v1619 = vpop.f32.mrf.mxu0
        %v1620 = vadd.f32 %v1531, %v1619
        %v1621 = vpop.f32.mrf.mxu0
        %v1622 = vadd.f32 %v1533, %v1621
        %1623 = vmatmul.bf16.gmra.mxu0 %v894
        %v1624 = vpop.f32.mrf.mxu0
        %v1625 = vadd.f32 %v1536, %v1624
        %v1626 = vpop.f32.mrf.mxu0
        %v1627 = vadd.f32 %v1538, %v1626
        %1628 = vmatmul.bf16.gmra.mxu0 %v901
        %v1629 = vpop.f32.mrf.mxu0
        %v1630 = vadd.f32 %v1541, %v1629
        %v1631 = vpop.f32.mrf.mxu0
        %v1632 = vadd.f32 %v1543, %v1631
        %1633 = vmatmul.bf16.gmra.mxu0 %v908
        %v1634 = vpop.f32.mrf.mxu0
        %v1635 = vadd.f32 %v1546, %v1634
        %v1636 = vpop.f32.mrf.mxu0
        %v1637 = vadd.f32 %v1548, %v1636
        %1638 = vmatmul.bf16.gmra.mxu0 %v915
        %v1639 = vpop.f32.mrf.mxu0
        %v1640 = vadd.f32 %v1551, %v1639
        %v1641 = vpop.f32.mrf.mxu0
        %v1642 = vadd.f32 %v1553, %v1641
        %1643 = vmatmul.bf16.gmra.mxu0 %v922
        %v1644 = vpop.f32.mrf.mxu0
        %v1645 = vadd.f32 %v1556, %v1644
        %v1646 = vpop.f32.mrf.mxu0
        %v1647 = vadd.f32 %v1558, %v1646
        %1648 = vmatmul.bf16.gmra.mxu0 %v929
        %v1649 = vpop.f32.mrf.mxu0
        %v1650 = vadd.f32 %v1561, %v1649
        %v1651 = vpop.f32.mrf.mxu0
        %v1652 = vadd.f32 %v1563, %v1651
        %1653 = vmatmul.bf16.gmra.mxu0 %v936
        %v1654 = vpop.f32.mrf.mxu0
        %v1655 = vadd.f32 %v1566, %v1654
        %v1656 = vpop.f32.mrf.mxu0
        %v1657 = vadd.f32 %v1568, %v1656
        %1658 = vmatmul.bf16.gmra.mxu0 %v943
        %v1659 = vpop.f32.mrf.mxu0
        %v1660 = vadd.f32 %v1571, %v1659
        %v1661 = vpop.f32.mrf.mxu0
        %v1662 = vadd.f32 %v1573, %v1661
        %1663 = vmatmul.bf16.gmra.mxu0 %v950
        %v1664 = vpop.f32.mrf.mxu0
        %v1665 = vadd.f32 %v1576, %v1664
        %v1666 = vpop.f32.mrf.mxu0
        %v1667 = vadd.f32 %v1578, %v1666
        %1668 = vmatmul.bf16.gmra.mxu0 %v957
        %v1669 = vpop.f32.mrf.mxu0
        %v1670 = vadd.f32 %v1581, %v1669
        %v1671 = vpop.f32.mrf.mxu0
        %v1672 = vadd.f32 %v1583, %v1671
        %1673 = vmatmul.bf16.gmra.mxu0 %v964
        %v1674 = vpop.f32.mrf.mxu0
        %v1675 = vadd.f32 %v1586, %v1674
        %v1676 = vpop.f32.mrf.mxu0
        %v1677 = vadd.f32 %v1588, %v1676
        %1678 = vmatmul.bf16.gmra.mxu0 %v971
        %v1679 = vpop.f32.mrf.mxu0
        %v1680 = vadd.f32 %v1591, %v1679
        %v1681 = vpop.f32.mrf.mxu0
        %v1682 = vadd.f32 %v1593, %v1681
        %1683 = vmatmul.bf16.gmra.mxu0 %v978
        %v1684 = vpop.f32.mrf.mxu0
        %v1685 = vadd.f32 %v1596, %v1684
        %v1686 = vpop.f32.mrf.mxu0
        %v1687 = vadd.f32 %v1598, %v1686
        %1688 = vdwg.mxu0
        %1689 = vmatpush.bf16.msra.mxu0 %v1306
        %1690 = vmatpush.bf16.msra.mxu0 %v1305
        %1691 = vmatpush.bf16.msra.mxu0 %v1304
        %1692 = vmatpush.bf16.msra.mxu0 %v1303
        %1693 = vmatpush.bf16.msra.mxu0 %v1302
        %1694 = vmatpush.bf16.msra.mxu0 %v1301
        %1695 = vmatpush.bf16.msra.mxu0 %v1300
        %1696 = vmatpush.bf16.msra.mxu0 %v1299
        %1697 = vmatmul.bf16.gmra.mxu0 %v874
        %v1698 = vpop.f32.mrf.mxu0
        %v1699 = vadd.f32 %v1610, %v1698
        %v1700 = vpop.f32.mrf.mxu0
        %v1701 = vadd.f32 %v1612, %v1700
        %1702 = vmatmul.bf16.gmra.mxu0 %v881
        %v1703 = vpop.f32.mrf.mxu0
        %v1704 = vadd.f32 %v1615, %v1703
        %v1705 = vpop.f32.mrf.mxu0
        %v1706 = vadd.f32 %v1617, %v1705
        %1707 = vmatmul.bf16.gmra.mxu0 %v888
        %v1708 = vpop.f32.mrf.mxu0
        %v1709 = vadd.f32 %v1620, %v1708
        %v1710 = vpop.f32.mrf.mxu0
        %v1711 = vadd.f32 %v1622, %v1710
        %1712 = vmatmul.bf16.gmra.mxu0 %v895
        %v1713 = vpop.f32.mrf.mxu0
        %v1714 = vadd.f32 %v1625, %v1713
        %v1715 = vpop.f32.mrf.mxu0
        %v1716 = vadd.f32 %v1627, %v1715
        %1717 = vmatmul.bf16.gmra.mxu0 %v902
        %v1718 = vpop.f32.mrf.mxu0
        %v1719 = vadd.f32 %v1630, %v1718
        %v1720 = vpop.f32.mrf.mxu0
        %v1721 = vadd.f32 %v1632, %v1720
        %1722 = vmatmul.bf16.gmra.mxu0 %v909
        %v1723 = vpop.f32.mrf.mxu0
        %v1724 = vadd.f32 %v1635, %v1723
        %v1725 = vpop.f32.mrf.mxu0
        %v1726 = vadd.f32 %v1637, %v1725
        %1727 = vmatmul.bf16.gmra.mxu0 %v916
        %v1728 = vpop.f32.mrf.mxu0
        %v1729 = vadd.f32 %v1640, %v1728
        %v1730 = vpop.f32.mrf.mxu0
        %v1731 = vadd.f32 %v1642, %v1730
        %1732 = vmatmul.bf16.gmra.mxu0 %v923
        %v1733 = vpop.f32.mrf.mxu0
        %v1734 = vadd.f32 %v1645, %v1733
        %v1735 = vpop.f32.mrf.mxu0
        %v1736 = vadd.f32 %v1647, %v1735
        %1737 = vmatmul.bf16.gmra.mxu0 %v930
        %v1738 = vpop.f32.mrf.mxu0
        %v1739 = vadd.f32 %v1650, %v1738
        %v1740 = vpop.f32.mrf.mxu0
        %v1741 = vadd.f32 %v1652, %v1740
        %1742 = vmatmul.bf16.gmra.mxu0 %v937
        %v1743 = vpop.f32.mrf.mxu0
        %v1744 = vadd.f32 %v1655, %v1743
        %v1745 = vpop.f32.mrf.mxu0
        %v1746 = vadd.f32 %v1657, %v1745
        %1747 = vmatmul.bf16.gmra.mxu0 %v944
        %v1748 = vpop.f32.mrf.mxu0
        %v1749 = vadd.f32 %v1660, %v1748
        %v1750 = vpop.f32.mrf.mxu0
        %v1751 = vadd.f32 %v1662, %v1750
        %1752 = vmatmul.bf16.gmra.mxu0 %v951
        %v1753 = vpop.f32.mrf.mxu0
        %v1754 = vadd.f32 %v1665, %v1753
        %v1755 = vpop.f32.mrf.mxu0
        %v1756 = vadd.f32 %v1667, %v1755
        %1757 = vmatmul.bf16.gmra.mxu0 %v958
        %v1758 = vpop.f32.mrf.mxu0
        %v1759 = vadd.f32 %v1670, %v1758
        %v1760 = vpop.f32.mrf.mxu0
        %v1761 = vadd.f32 %v1672, %v1760
        %1762 = vmatmul.bf16.gmra.mxu0 %v965
        %v1763 = vpop.f32.mrf.mxu0
        %v1764 = vadd.f32 %v1675, %v1763
        %v1765 = vpop.f32.mrf.mxu0
        %v1766 = vadd.f32 %v1677, %v1765
        %1767 = vmatmul.bf16.gmra.mxu0 %v972
        %v1768 = vpop.f32.mrf.mxu0
        %v1769 = vadd.f32 %v1680, %v1768
        %v1770 = vpop.f32.mrf.mxu0
        %v1771 = vadd.f32 %v1682, %v1770
        %1772 = vmatmul.bf16.gmra.mxu0 %v979
        %v1773 = vpop.f32.mrf.mxu0
        %v1774 = vadd.f32 %v1685, %v1773
        %v1775 = vpop.f32.mrf.mxu0
        %v1776 = vadd.f32 %v1687, %v1775
        %1777 = vdwg.mxu0
        %1778 = vmatpush.bf16.msra.mxu0 %v1314
        %1779 = vmatpush.bf16.msra.mxu0 %v1313
        %1780 = vmatpush.bf16.msra.mxu0 %v1312
        %1781 = vmatpush.bf16.msra.mxu0 %v1311
        %1782 = vmatpush.bf16.msra.mxu0 %v1310
        %1783 = vmatpush.bf16.msra.mxu0 %v1309
        %1784 = vmatpush.bf16.msra.mxu0 %v1308
        %1785 = vmatpush.bf16.msra.mxu0 %v1307
        %1786 = vmatmul.bf16.gmra.mxu0 %v875
        %v1787 = vpop.f32.mrf.mxu0
        %v1788 = vadd.f32 %v1699, %v1787
        %v1789 = vpop.f32.mrf.mxu0
        %v1790 = vadd.f32 %v1701, %v1789
        %1791 = vmatmul.bf16.gmra.mxu0 %v882
        %v1792 = vpop.f32.mrf.mxu0
        %v1793 = vadd.f32 %v1704, %v1792
        %v1794 = vpop.f32.mrf.mxu0
        %v1795 = vadd.f32 %v1706, %v1794
        %1796 = vmatmul.bf16.gmra.mxu0 %v889
        %v1797 = vpop.f32.mrf.mxu0
        %v1798 = vadd.f32 %v1709, %v1797
        %v1799 = vpop.f32.mrf.mxu0
        %v1800 = vadd.f32 %v1711, %v1799
        %1801 = vmatmul.bf16.gmra.mxu0 %v896
        %v1802 = vpop.f32.mrf.mxu0
        %v1803 = vadd.f32 %v1714, %v1802
        %v1804 = vpop.f32.mrf.mxu0
        %v1805 = vadd.f32 %v1716, %v1804
        %1806 = vmatmul.bf16.gmra.mxu0 %v903
        %v1807 = vpop.f32.mrf.mxu0
        %v1808 = vadd.f32 %v1719, %v1807
        %v1809 = vpop.f32.mrf.mxu0
        %v1810 = vadd.f32 %v1721, %v1809
        %1811 = vmatmul.bf16.gmra.mxu0 %v910
        %v1812 = vpop.f32.mrf.mxu0
        %v1813 = vadd.f32 %v1724, %v1812
        %v1814 = vpop.f32.mrf.mxu0
        %v1815 = vadd.f32 %v1726, %v1814
        %1816 = vmatmul.bf16.gmra.mxu0 %v917
        %v1817 = vpop.f32.mrf.mxu0
        %v1818 = vadd.f32 %v1729, %v1817
        %v1819 = vpop.f32.mrf.mxu0
        %v1820 = vadd.f32 %v1731, %v1819
        %1821 = vmatmul.bf16.gmra.mxu0 %v924
        %v1822 = vpop.f32.mrf.mxu0
        %v1823 = vadd.f32 %v1734, %v1822
        %v1824 = vpop.f32.mrf.mxu0
        %v1825 = vadd.f32 %v1736, %v1824
        %1826 = vmatmul.bf16.gmra.mxu0 %v931
        %v1827 = vpop.f32.mrf.mxu0
        %v1828 = vadd.f32 %v1739, %v1827
        %v1829 = vpop.f32.mrf.mxu0
        %v1830 = vadd.f32 %v1741, %v1829
        %1831 = vmatmul.bf16.gmra.mxu0 %v938
        %v1832 = vpop.f32.mrf.mxu0
        %v1833 = vadd.f32 %v1744, %v1832
        %v1834 = vpop.f32.mrf.mxu0
        %v1835 = vadd.f32 %v1746, %v1834
        %1836 = vmatmul.bf16.gmra.mxu0 %v945
        %v1837 = vpop.f32.mrf.mxu0
        %v1838 = vadd.f32 %v1749, %v1837
        %v1839 = vpop.f32.mrf.mxu0
        %v1840 = vadd.f32 %v1751, %v1839
        %1841 = vmatmul.bf16.gmra.mxu0 %v952
        %v1842 = vpop.f32.mrf.mxu0
        %v1843 = vadd.f32 %v1754, %v1842
        %v1844 = vpop.f32.mrf.mxu0
        %v1845 = vadd.f32 %v1756, %v1844
        %1846 = vmatmul.bf16.gmra.mxu0 %v959
        %v1847 = vpop.f32.mrf.mxu0
        %v1848 = vadd.f32 %v1759, %v1847
        %v1849 = vpop.f32.mrf.mxu0
        %v1850 = vadd.f32 %v1761, %v1849
        %1851 = vmatmul.bf16.gmra.mxu0 %v966
        %v1852 = vpop.f32.mrf.mxu0
        %v1853 = vadd.f32 %v1764, %v1852
        %v1854 = vpop.f32.mrf.mxu0
        %v1855 = vadd.f32 %v1766, %v1854
        %1856 = vmatmul.bf16.gmra.mxu0 %v973
        %v1857 = vpop.f32.mrf.mxu0
        %v1858 = vadd.f32 %v1769, %v1857
        %v1859 = vpop.f32.mrf.mxu0
        %v1860 = vadd.f32 %v1771, %v1859
        %1861 = vmatmul.bf16.gmra.mxu0 %v980
        %v1862 = vpop.f32.mrf.mxu0
        %v1863 = vadd.f32 %v1774, %v1862
        %v1864 = vpop.f32.mrf.mxu0
        %v1865 = vadd.f32 %v1776, %v1864
        %1866 = vdwg.mxu0
        %1867 = vmatpush.bf16.msra.mxu0 %v1322
        %1868 = vmatpush.bf16.msra.mxu0 %v1321
        %1869 = vmatpush.bf16.msra.mxu0 %v1320
        %1870 = vmatpush.bf16.msra.mxu0 %v1319
        %1871 = vmatpush.bf16.msra.mxu0 %v1318
        %1872 = vmatpush.bf16.msra.mxu0 %v1317
        %1873 = vmatpush.bf16.msra.mxu0 %v1316
        %1874 = vmatpush.bf16.msra.mxu0 %v1315
        %1875 = vmatmul.bf16.gmra.mxu0 %v876
        %v1876 = vpop.f32.mrf.mxu0
        %v1877 = vadd.f32 %v1788, %v1876
        %v1878 = vpop.f32.mrf.mxu0
        %v1879 = vadd.f32 %v1790, %v1878
        %1880 = vmatmul.bf16.gmra.mxu0 %v883
        %v1881 = vpop.f32.mrf.mxu0
        %v1882 = vadd.f32 %v1793, %v1881
        %v1883 = vpop.f32.mrf.mxu0
        %v1884 = vadd.f32 %v1795, %v1883
        %1885 = vmatmul.bf16.gmra.mxu0 %v890
        %v1886 = vpop.f32.mrf.mxu0
        %v1887 = vadd.f32 %v1798, %v1886
        %v1888 = vpop.f32.mrf.mxu0
        %v1889 = vadd.f32 %v1800, %v1888
        %1890 = vmatmul.bf16.gmra.mxu0 %v897
        %v1891 = vpop.f32.mrf.mxu0
        %v1892 = vadd.f32 %v1803, %v1891
        %v1893 = vpop.f32.mrf.mxu0
        %v1894 = vadd.f32 %v1805, %v1893
        %1895 = vmatmul.bf16.gmra.mxu0 %v904
        %v1896 = vpop.f32.mrf.mxu0
        %v1897 = vadd.f32 %v1808, %v1896
        %v1898 = vpop.f32.mrf.mxu0
        %v1899 = vadd.f32 %v1810, %v1898
        %1900 = vmatmul.bf16.gmra.mxu0 %v911
        %v1901 = vpop.f32.mrf.mxu0
        %v1902 = vadd.f32 %v1813, %v1901
        %v1903 = vpop.f32.mrf.mxu0
        %v1904 = vadd.f32 %v1815, %v1903
        %1905 = vmatmul.bf16.gmra.mxu0 %v918
        %v1906 = vpop.f32.mrf.mxu0
        %v1907 = vadd.f32 %v1818, %v1906
        %v1908 = vpop.f32.mrf.mxu0
        %v1909 = vadd.f32 %v1820, %v1908
        %1910 = vmatmul.bf16.gmra.mxu0 %v925
        %v1911 = vpop.f32.mrf.mxu0
        %v1912 = vadd.f32 %v1823, %v1911
        %v1913 = vpop.f32.mrf.mxu0
        %v1914 = vadd.f32 %v1825, %v1913
        %1915 = vmatmul.bf16.gmra.mxu0 %v932
        %v1916 = vpop.f32.mrf.mxu0
        %v1917 = vadd.f32 %v1828, %v1916
        %v1918 = vpop.f32.mrf.mxu0
        %v1919 = vadd.f32 %v1830, %v1918
        %1920 = vmatmul.bf16.gmra.mxu0 %v939
        %v1921 = vpop.f32.mrf.mxu0
        %v1922 = vadd.f32 %v1833, %v1921
        %v1923 = vpop.f32.mrf.mxu0
        %v1924 = vadd.f32 %v1835, %v1923
        %1925 = vmatmul.bf16.gmra.mxu0 %v946
        %v1926 = vpop.f32.mrf.mxu0
        %v1927 = vadd.f32 %v1838, %v1926
        %v1928 = vpop.f32.mrf.mxu0
        %v1929 = vadd.f32 %v1840, %v1928
        %1930 = vmatmul.bf16.gmra.mxu0 %v953
        %v1931 = vpop.f32.mrf.mxu0
        %v1932 = vadd.f32 %v1843, %v1931
        %v1933 = vpop.f32.mrf.mxu0
        %v1934 = vadd.f32 %v1845, %v1933
        %1935 = vmatmul.bf16.gmra.mxu0 %v960
        %v1936 = vpop.f32.mrf.mxu0
        %v1937 = vadd.f32 %v1848, %v1936
        %v1938 = vpop.f32.mrf.mxu0
        %v1939 = vadd.f32 %v1850, %v1938
        %1940 = vmatmul.bf16.gmra.mxu0 %v967
        %v1941 = vpop.f32.mrf.mxu0
        %v1942 = vadd.f32 %v1853, %v1941
        %v1943 = vpop.f32.mrf.mxu0
        %v1944 = vadd.f32 %v1855, %v1943
        %1945 = vmatmul.bf16.gmra.mxu0 %v974
        %v1946 = vpop.f32.mrf.mxu0
        %v1947 = vadd.f32 %v1858, %v1946
        %v1948 = vpop.f32.mrf.mxu0
        %v1949 = vadd.f32 %v1860, %v1948
        %1950 = vmatmul.bf16.gmra.mxu0 %v981
        %v1951 = vpop.f32.mrf.mxu0
        %v1952 = vadd.f32 %v1863, %v1951
        %v1953 = vpop.f32.mrf.mxu0
        %v1954 = vadd.f32 %v1865, %v1953
        %1955 = vdwg.mxu0
        %1956 = vmatpush.bf16.msra.mxu0 0
        %1957 = vmatpush.bf16.msra.mxu0 0
        %1958 = vmatpush.bf16.msra.mxu0 0
        %1959 = vmatpush.bf16.msra.mxu0 0
        %1960 = vmatpush.bf16.msra.mxu0 0
        %1961 = vmatpush.bf16.msra.mxu0 0
        %1962 = vmatpush.bf16.msra.mxu0 0
        %1963 = vmatpush.bf16.msra.mxu0 %v1323
        %1964 = vmatmul.bf16.gmra.mxu0 %v1375
        %v1965 = vpop.f32.mrf.mxu0
        %v1966 = vadd.f32 %v1877, %v1965
        %v1967 = vpop.f32.mrf.mxu0
        %v1968 = vadd.f32 %v1879, %v1967
        %1969 = vmatmul.bf16.gmra.mxu0 %v1378
        %v1970 = vpop.f32.mrf.mxu0
        %v1971 = vadd.f32 %v1882, %v1970
        %v1972 = vpop.f32.mrf.mxu0
        %v1973 = vadd.f32 %v1884, %v1972
        %1974 = vmatmul.bf16.gmra.mxu0 %v1381
        %v1975 = vpop.f32.mrf.mxu0
        %v1976 = vadd.f32 %v1887, %v1975
        %v1977 = vpop.f32.mrf.mxu0
        %v1978 = vadd.f32 %v1889, %v1977
        %1979 = vmatmul.bf16.gmra.mxu0 %v1384
        %v1980 = vpop.f32.mrf.mxu0
        %v1981 = vadd.f32 %v1892, %v1980
        %v1982 = vpop.f32.mrf.mxu0
        %v1983 = vadd.f32 %v1894, %v1982
        %1984 = vmatmul.bf16.gmra.mxu0 %v1387
        %v1985 = vpop.f32.mrf.mxu0
        %v1986 = vadd.f32 %v1897, %v1985
        %v1987 = vpop.f32.mrf.mxu0
        %v1988 = vadd.f32 %v1899, %v1987
        %1989 = vmatmul.bf16.gmra.mxu0 %v1390
        %v1990 = vpop.f32.mrf.mxu0
        %v1991 = vadd.f32 %v1902, %v1990
        %v1992 = vpop.f32.mrf.mxu0
        %v1993 = vadd.f32 %v1904, %v1992
        %1994 = vmatmul.bf16.gmra.mxu0 %v1393
        %v1995 = vpop.f32.mrf.mxu0
        %v1996 = vadd.f32 %v1907, %v1995
        %v1997 = vpop.f32.mrf.mxu0
        %v1998 = vadd.f32 %v1909, %v1997
        %1999 = vmatmul.bf16.gmra.mxu0 %v1396
        %v2000 = vpop.f32.mrf.mxu0
        %v2001 = vadd.f32 %v1912, %v2000
        %v2002 = vpop.f32.mrf.mxu0
        %v2003 = vadd.f32 %v1914, %v2002
        %2004 = vmatmul.bf16.gmra.mxu0 %v1399
        %v2005 = vpop.f32.mrf.mxu0
        %v2006 = vadd.f32 %v1917, %v2005
        %v2007 = vpop.f32.mrf.mxu0
        %v2008 = vadd.f32 %v1919, %v2007
        %2009 = vmatmul.bf16.gmra.mxu0 %v1402
        %v2010 = vpop.f32.mrf.mxu0
        %v2011 = vadd.f32 %v1922, %v2010
        %v2012 = vpop.f32.mrf.mxu0
        %v2013 = vadd.f32 %v1924, %v2012
        %2014 = vmatmul.bf16.gmra.mxu0 %v1405
        %v2015 = vpop.f32.mrf.mxu0
        %v2016 = vadd.f32 %v1927, %v2015
        %v2017 = vpop.f32.mrf.mxu0
        %v2018 = vadd.f32 %v1929, %v2017
        %2019 = vmatmul.bf16.gmra.mxu0 %v1408
        %v2020 = vpop.f32.mrf.mxu0
        %v2021 = vadd.f32 %v1932, %v2020
        %v2022 = vpop.f32.mrf.mxu0
        %v2023 = vadd.f32 %v1934, %v2022
        %2024 = vmatmul.bf16.gmra.mxu0 %v1411
        %v2025 = vpop.f32.mrf.mxu0
        %v2026 = vadd.f32 %v1937, %v2025
        %v2027 = vpop.f32.mrf.mxu0
        %v2028 = vadd.f32 %v1939, %v2027
        %2029 = vmatmul.bf16.gmra.mxu0 %v1414
        %v2030 = vpop.f32.mrf.mxu0
        %v2031 = vadd.f32 %v1942, %v2030
        %v2032 = vpop.f32.mrf.mxu0
        %v2033 = vadd.f32 %v1944, %v2032
        %2034 = vmatmul.bf16.gmra.mxu0 %v1417
        %v2035 = vpop.f32.mrf.mxu0
        %v2036 = vadd.f32 %v1947, %v2035
        %v2037 = vpop.f32.mrf.mxu0
        %v2038 = vadd.f32 %v1949, %v2037
        %2039 = vmatmul.bf16.gmra.mxu0 %v1420
        %v2040 = vpop.f32.mrf.mxu0
        %v2041 = vadd.f32 %v1952, %v2040
        %v2042 = vpop.f32.mrf.mxu0
        %v2043 = vadd.f32 %v1954, %v2042
        %2044 = vdwg.mxu0
        %v2045 = vmax.f32 %v1966, 0.0
        %v2046 = vmax.f32 %v1968, 0.0
        %v2047 = vmax.f32 %v1971, 0.0
        %v2048 = vmax.f32 %v1973, 0.0
        %v2049 = vmax.f32 %v1976, 0.0
        %v2050 = vmax.f32 %v1978, 0.0
        %v2051 = vmax.f32 %v1981, 0.0
        %v2052 = vmax.f32 %v1983, 0.0
        %v2053 = vmax.f32 %v1986, 0.0
        %v2054 = vmax.f32 %v1988, 0.0
        %v2055 = vmax.f32 %v1991, 0.0
        %v2056 = vmax.f32 %v1993, 0.0
        %v2057 = vmax.f32 %v1996, 0.0
        %v2058 = vmax.f32 %v1998, 0.0
        %v2059 = vmax.f32 %v2001, 0.0
        %v2060 = vmax.f32 %v2003, 0.0
        %v2061 = vmax.f32 %v2006, 0.0
        %v2062 = vmax.f32 %v2008, 0.0
        %v2063 = vmax.f32 %v2011, 0.0
        %v2064 = vmax.f32 %v2013, 0.0
        %v2065 = vmax.f32 %v2016, 0.0
        %v2066 = vmax.f32 %v2018, 0.0
        %v2067 = vmax.f32 %v2021, 0.0
        %v2068 = vmax.f32 %v2023, 0.0
        %v2069 = vmax.f32 %v2026, 0.0
        %v2070 = vmax.f32 %v2028, 0.0
        %v2071 = vmax.f32 %v2031, 0.0
        %v2072 = vmax.f32 %v2033, 0.0
        %v2073 = vmax.f32 %v2036, 0.0
        %v2074 = vmax.f32 %v2038, 0.0
        %v2075 = vmax.f32 %v2041, 0.0
        %v2076 = vmax.f32 %v2043, 0.0
        %v2077 = vpack.c.bf16 %v2046, %v2045
        %v2078 = vpack.c.bf16 %v2048, %v2047
        %v2079 = vpack.c.bf16 %v2050, %v2049
        %v2080 = vpack.c.bf16 %v2052, %v2051
        %v2081 = vpack.c.bf16 %v2054, %v2053
        %v2082 = vpack.c.bf16 %v2056, %v2055
        %v2083 = vpack.c.bf16 %v2058, %v2057
        %v2084 = vpack.c.bf16 %v2060, %v2059
        %v2085 = vpack.c.bf16 %v2062, %v2061
        %v2086 = vpack.c.bf16 %v2064, %v2063
        %v2087 = vpack.c.bf16 %v2066, %v2065
        %v2088 = vpack.c.bf16 %v2068, %v2067
        %v2089 = vpack.c.bf16 %v2070, %v2069
        %v2090 = vpack.c.bf16 %v2072, %v2071
        %v2091 = vpack.c.bf16 %v2074, %v2073
        %v2092 = vpack.c.bf16 %v2076, %v2075
        %v2093 = vld [vmem:[%s2] sm:$0xf]
        %v2094 = vld [vmem:[%s2 + $0x4] sm:$0xf]
        %v2095 = vld [vmem:[%s2 + $0x8] sm:$0xf]
        %v2096 = vld [vmem:[%s2 + $0xc] sm:$0xf]
        %v2097 = vld [vmem:[%s2 + $0x10] sm:$0xf]
        %v2098 = vld [vmem:[%s2 + $0x14] sm:$0xf]
        %v2099 = vld [vmem:[%s2 + $0x18] sm:$0xf]
        %v2100 = vld [vmem:[%s2 + $0x1c] sm:$0xf]
        %v2101 = vld [vmem:[%s2 + $0x20] sm:$0xf]
        %v2102 = vld [vmem:[%s2 + $0x24] sm:$0xf]
        %v2103 = vld [vmem:[%s2 + $0x28] sm:$0xf]
        %v2104 = vld [vmem:[%s2 + $0x2c] sm:$0xf]
        %v2105 = vld [vmem:[%s2 + $0x30] sm:$0xf]
        %v2106 = vld [vmem:[%s2 + $0x34] sm:$0xf]
        %v2107 = vld [vmem:[%s2 + $0x38] sm:$0xf]
        %v2108 = vld [vmem:[%s2 + $0x3c] sm:$0xf]
        %v2109 = vperm.slane %v285, 0
        %v2126 = vunpack.c.l.b16 %v2093
        %v2127 = vunpack.c.l.b16 %v2094
        %v2128 = vunpack.c.l.b16 %v2095
        %v2129 = vunpack.c.l.b16 %v2096
        %v2130 = vunpack.c.l.b16 %v2097
        %v2131 = vunpack.c.l.b16 %v2098
        %v2132 = vunpack.c.l.b16 %v2099
        %v2133 = vunpack.c.l.b16 %v2100
        %v2134 = vunpack.c.l.b16 %v2101
        %v2135 = vunpack.c.l.b16 %v2102
        %v2136 = vunpack.c.l.b16 %v2103
        %v2137 = vunpack.c.l.b16 %v2104
        %v2138 = vunpack.c.l.b16 %v2105
        %v2139 = vunpack.c.l.b16 %v2106
        %v2140 = vunpack.c.l.b16 %v2107
        %v2141 = vunpack.c.l.b16 %v2108
        %v2142 = vpack.c.b16 %v2127, %v2126
        %v2143 = vpack.c.b16 %v2129, %v2128
        %v2144 = vpack.c.b16 %v2131, %v2130
        %v2145 = vpack.c.b16 %v2133, %v2132
        %v2146 = vpack.c.b16 %v2135, %v2134
        %v2147 = vpack.c.b16 %v2137, %v2136
        %v2148 = vpack.c.b16 %v2139, %v2138
        %v2149 = vpack.c.b16 %v2141, %v2140
        %2158 = vmatpush.bf16.msra.mxu0 %v2149
        %2159 = vmatpush.bf16.msra.mxu0 %v2148
        %2160 = vmatpush.bf16.msra.mxu0 %v2147
        %2161 = vmatpush.bf16.msra.mxu0 %v2146
        %2162 = vmatpush.bf16.msra.mxu0 %v2145
        %2163 = vmatpush.bf16.msra.mxu0 %v2144
        %2164 = vmatpush.bf16.msra.mxu0 %v2143
        %2165 = vmatpush.bf16.msra.mxu0 %v2142
        %2166 = vmatmul.bf16.gmra.mxu0 %v2077
        %v2167 = vpop.f32.mrf.mxu0
        %v2168 = vadd.f32 %v2109, %v2167
        %v2169 = vpop.f32.mrf.mxu0
        %v2170 = vadd.f32 %v2109, %v2169
        %2171 = vmatmul.bf16.gmra.mxu0 %v2078
        %v2172 = vpop.f32.mrf.mxu0
        %v2173 = vadd.f32 %v2109, %v2172
        %v2174 = vpop.f32.mrf.mxu0
        %v2175 = vadd.f32 %v2109, %v2174
        %2176 = vmatmul.bf16.gmra.mxu0 %v2079
        %v2177 = vpop.f32.mrf.mxu0
        %v2178 = vadd.f32 %v2109, %v2177
        %v2179 = vpop.f32.mrf.mxu0
        %v2180 = vadd.f32 %v2109, %v2179
        %2181 = vmatmul.bf16.gmra.mxu0 %v2080
        %v2182 = vpop.f32.mrf.mxu0
        %v2183 = vadd.f32 %v2109, %v2182
        %v2184 = vpop.f32.mrf.mxu0
        %v2185 = vadd.f32 %v2109, %v2184
        %2186 = vmatmul.bf16.gmra.mxu0 %v2081
        %v2187 = vpop.f32.mrf.mxu0
        %v2188 = vadd.f32 %v2109, %v2187
        %v2189 = vpop.f32.mrf.mxu0
        %v2190 = vadd.f32 %v2109, %v2189
        %2191 = vmatmul.bf16.gmra.mxu0 %v2082
        %v2192 = vpop.f32.mrf.mxu0
        %v2193 = vadd.f32 %v2109, %v2192
        %v2194 = vpop.f32.mrf.mxu0
        %v2195 = vadd.f32 %v2109, %v2194
        %2196 = vmatmul.bf16.gmra.mxu0 %v2083
        %v2197 = vpop.f32.mrf.mxu0
        %v2198 = vadd.f32 %v2109, %v2197
        %v2199 = vpop.f32.mrf.mxu0
        %v2200 = vadd.f32 %v2109, %v2199
        %2201 = vmatmul.bf16.gmra.mxu0 %v2084
        %v2202 = vpop.f32.mrf.mxu0
        %v2203 = vadd.f32 %v2109, %v2202
        %v2204 = vpop.f32.mrf.mxu0
        %v2205 = vadd.f32 %v2109, %v2204
        %2206 = vmatmul.bf16.gmra.mxu0 %v2085
        %v2207 = vpop.f32.mrf.mxu0
        %v2208 = vadd.f32 %v2109, %v2207
        %v2209 = vpop.f32.mrf.mxu0
        %v2210 = vadd.f32 %v2109, %v2209
        %2211 = vmatmul.bf16.gmra.mxu0 %v2086
        %v2212 = vpop.f32.mrf.mxu0
        %v2213 = vadd.f32 %v2109, %v2212
        %v2214 = vpop.f32.mrf.mxu0
        %v2215 = vadd.f32 %v2109, %v2214
        %2216 = vmatmul.bf16.gmra.mxu0 %v2087
        %v2217 = vpop.f32.mrf.mxu0
        %v2218 = vadd.f32 %v2109, %v2217
        %v2219 = vpop.f32.mrf.mxu0
        %v2220 = vadd.f32 %v2109, %v2219
        %2221 = vmatmul.bf16.gmra.mxu0 %v2088
        %v2222 = vpop.f32.mrf.mxu0
        %v2223 = vadd.f32 %v2109, %v2222
        %v2224 = vpop.f32.mrf.mxu0
        %v2225 = vadd.f32 %v2109, %v2224
        %2226 = vmatmul.bf16.gmra.mxu0 %v2089
        %v2227 = vpop.f32.mrf.mxu0
        %v2228 = vadd.f32 %v2109, %v2227
        %v2229 = vpop.f32.mrf.mxu0
        %v2230 = vadd.f32 %v2109, %v2229
        %2231 = vmatmul.bf16.gmra.mxu0 %v2090
        %v2232 = vpop.f32.mrf.mxu0
        %v2233 = vadd.f32 %v2109, %v2232
        %v2234 = vpop.f32.mrf.mxu0
        %v2235 = vadd.f32 %v2109, %v2234
        %2236 = vmatmul.bf16.gmra.mxu0 %v2091
        %v2237 = vpop.f32.mrf.mxu0
        %v2238 = vadd.f32 %v2109, %v2237
        %v2239 = vpop.f32.mrf.mxu0
        %v2240 = vadd.f32 %v2109, %v2239
        %2241 = vmatmul.bf16.gmra.mxu0 %v2092
        %v2242 = vpop.f32.mrf.mxu0
        %v2243 = vadd.f32 %v2109, %v2242
        %v2244 = vpop.f32.mrf.mxu0
        %v2245 = vadd.f32 %v2109, %v2244
        %2246 = vdwg.mxu0
        %v2247 = vmax.f32 %v2168, 0.0
        %v2248 = vmax.f32 %v2170, 0.0
        %v2249 = vmax.f32 %v2173, 0.0
        %v2250 = vmax.f32 %v2175, 0.0
        %v2251 = vmax.f32 %v2178, 0.0
        %v2252 = vmax.f32 %v2180, 0.0
        %v2253 = vmax.f32 %v2183, 0.0
        %v2254 = vmax.f32 %v2185, 0.0
        %v2255 = vmax.f32 %v2188, 0.0
        %v2256 = vmax.f32 %v2190, 0.0
        %v2257 = vmax.f32 %v2193, 0.0
        %v2258 = vmax.f32 %v2195, 0.0
        %v2259 = vmax.f32 %v2198, 0.0
        %v2260 = vmax.f32 %v2200, 0.0
        %v2261 = vmax.f32 %v2203, 0.0
        %v2262 = vmax.f32 %v2205, 0.0
        %v2263 = vmax.f32 %v2208, 0.0
        %v2264 = vmax.f32 %v2210, 0.0
        %v2265 = vmax.f32 %v2213, 0.0
        %v2266 = vmax.f32 %v2215, 0.0
        %v2267 = vmax.f32 %v2218, 0.0
        %v2268 = vmax.f32 %v2220, 0.0
        %v2269 = vmax.f32 %v2223, 0.0
        %v2270 = vmax.f32 %v2225, 0.0
        %v2271 = vmax.f32 %v2228, 0.0
        %v2272 = vmax.f32 %v2230, 0.0
        %v2273 = vmax.f32 %v2233, 0.0
        %v2274 = vmax.f32 %v2235, 0.0
        %v2275 = vmax.f32 %v2238, 0.0
        %v2276 = vmax.f32 %v2240, 0.0
        %v2277 = vmax.f32 %v2243, 0.0
        %v2278 = vmax.f32 %v2245, 0.0
        %v2279 = vperm.slane %v286, 0
        %2281 = vrot.lane.b32.xlu0 %v2279, 16
        %v2282 = vpop.permute.xlu0 %2281
        %v2284 = vmul.f32 %v2247, %v2282
        %v2285 = vmul.f32 %v2248, %v2282
        %v2286 = vmul.f32 %v2249, %v2282
        %v2287 = vmul.f32 %v2250, %v2282
        %v2288 = vmul.f32 %v2251, %v2282
        %v2289 = vmul.f32 %v2252, %v2282
        %v2290 = vmul.f32 %v2253, %v2282
        %v2291 = vmul.f32 %v2254, %v2282
        %v2292 = vmul.f32 %v2255, %v2282
        %v2293 = vmul.f32 %v2256, %v2282
        %v2294 = vmul.f32 %v2257, %v2282
        %v2295 = vmul.f32 %v2258, %v2282
        %v2296 = vmul.f32 %v2259, %v2282
        %v2297 = vmul.f32 %v2260, %v2282
        %v2298 = vmul.f32 %v2261, %v2282
        %v2299 = vmul.f32 %v2262, %v2282
        %v2300 = vmul.f32 %v2263, %v2282
        %v2301 = vmul.f32 %v2264, %v2282
        %v2302 = vmul.f32 %v2265, %v2282
        %v2303 = vmul.f32 %v2266, %v2282
        %v2304 = vmul.f32 %v2267, %v2282
        %v2305 = vmul.f32 %v2268, %v2282
        %v2306 = vmul.f32 %v2269, %v2282
        %v2307 = vmul.f32 %v2270, %v2282
        %v2308 = vmul.f32 %v2271, %v2282
        %v2309 = vmul.f32 %v2272, %v2282
        %v2310 = vmul.f32 %v2273, %v2282
        %v2311 = vmul.f32 %v2274, %v2282
        %v2312 = vmul.f32 %v2275, %v2282
        %v2313 = vmul.f32 %v2276, %v2282
        %v2314 = vmul.f32 %v2277, %v2282
        %v2315 = vmul.f32 %v2278, %v2282
        %2348 = vrot.lane.b32.xlu0 %v2284, 112
        %v2349 = vpop.permute.xlu0 %2348
        %2350 = vrot.lane.b32.xlu0 %v2285, 112
        %v2351 = vpop.permute.xlu0 %2350
        %2352 = vrot.lane.b32.xlu0 %v2286, 112
        %v2353 = vpop.permute.xlu0 %2352
        %2354 = vrot.lane.b32.xlu0 %v2287, 112
        %v2355 = vpop.permute.xlu0 %2354
        %2356 = vrot.lane.b32.xlu0 %v2288, 112
        %v2357 = vpop.permute.xlu0 %2356
        %2358 = vrot.lane.b32.xlu0 %v2289, 112
        %v2359 = vpop.permute.xlu0 %2358
        %2360 = vrot.lane.b32.xlu0 %v2290, 112
        %v2361 = vpop.permute.xlu0 %2360
        %2362 = vrot.lane.b32.xlu0 %v2291, 112
        %v2363 = vpop.permute.xlu0 %2362
        %2364 = vrot.lane.b32.xlu0 %v2292, 112
        %v2365 = vpop.permute.xlu0 %2364
        %2366 = vrot.lane.b32.xlu0 %v2293, 112
        %v2367 = vpop.permute.xlu0 %2366
        %2368 = vrot.lane.b32.xlu0 %v2294, 112
        %v2369 = vpop.permute.xlu0 %2368
        %2370 = vrot.lane.b32.xlu0 %v2295, 112
        %v2371 = vpop.permute.xlu0 %2370
        %2372 = vrot.lane.b32.xlu0 %v2296, 112
        %v2373 = vpop.permute.xlu0 %2372
        %2374 = vrot.lane.b32.xlu0 %v2297, 112
        %v2375 = vpop.permute.xlu0 %2374
        %2376 = vrot.lane.b32.xlu0 %v2298, 112
        %v2377 = vpop.permute.xlu0 %2376
        %2378 = vrot.lane.b32.xlu0 %v2299, 112
        %v2379 = vpop.permute.xlu0 %2378
        %2380 = vrot.lane.b32.xlu0 %v2300, 112
        %v2381 = vpop.permute.xlu0 %2380
        %2382 = vrot.lane.b32.xlu0 %v2301, 112
        %v2383 = vpop.permute.xlu0 %2382
        %2384 = vrot.lane.b32.xlu0 %v2302, 112
        %v2385 = vpop.permute.xlu0 %2384
        %2386 = vrot.lane.b32.xlu0 %v2303, 112
        %v2387 = vpop.permute.xlu0 %2386
        %2388 = vrot.lane.b32.xlu0 %v2304, 112
        %v2389 = vpop.permute.xlu0 %2388
        %2390 = vrot.lane.b32.xlu0 %v2305, 112
        %v2391 = vpop.permute.xlu0 %2390
        %2392 = vrot.lane.b32.xlu0 %v2306, 112
        %v2393 = vpop.permute.xlu0 %2392
        %2394 = vrot.lane.b32.xlu0 %v2307, 112
        %v2395 = vpop.permute.xlu0 %2394
        %2396 = vrot.lane.b32.xlu0 %v2308, 112
        %v2397 = vpop.permute.xlu0 %2396
        %2398 = vrot.lane.b32.xlu0 %v2309, 112
        %v2399 = vpop.permute.xlu0 %2398
        %2400 = vrot.lane.b32.xlu0 %v2310, 112
        %v2401 = vpop.permute.xlu0 %2400
        %2402 = vrot.lane.b32.xlu0 %v2311, 112
        %v2403 = vpop.permute.xlu0 %2402
        %2404 = vrot.lane.b32.xlu0 %v2312, 112
        %v2405 = vpop.permute.xlu0 %2404
        %2406 = vrot.lane.b32.xlu0 %v2313, 112
        %v2407 = vpop.permute.xlu0 %2406
        %2408 = vrot.lane.b32.xlu0 %v2314, 112
        %v2409 = vpop.permute.xlu0 %2408
        %2410 = vrot.lane.b32.xlu0 %v2315, 112
        %v2411 = vpop.permute.xlu0 %2410
        %vm2444 = vcmask 64512
        %v2445 = vsel %vm2444, %v2349, 0.0
        %2446 = vadd.xlane.f32.xlu0 %v2445
        %v2447 = vpop.xlane.xlu0 %2446
        %v2448 = vsel %vm2444, %v2351, 0.0
        %2449 = vadd.xlane.f32.xlu0 %v2448
        %v2450 = vpop.xlane.xlu0 %2449
        %v2451 = vsel %vm2444, %v2353, 0.0
        %2452 = vadd.xlane.f32.xlu0 %v2451
        %v2453 = vpop.xlane.xlu0 %2452
        %v2454 = vsel %vm2444, %v2355, 0.0
        %2455 = vadd.xlane.f32.xlu0 %v2454
        %v2456 = vpop.xlane.xlu0 %2455
        %v2457 = vsel %vm2444, %v2357, 0.0
        %2458 = vadd.xlane.f32.xlu0 %v2457
        %v2459 = vpop.xlane.xlu0 %2458
        %v2460 = vsel %vm2444, %v2359, 0.0
        %2461 = vadd.xlane.f32.xlu0 %v2460
        %v2462 = vpop.xlane.xlu0 %2461
        %v2463 = vsel %vm2444, %v2361, 0.0
        %2464 = vadd.xlane.f32.xlu0 %v2463
        %v2465 = vpop.xlane.xlu0 %2464
        %v2466 = vsel %vm2444, %v2363, 0.0
        %2467 = vadd.xlane.f32.xlu0 %v2466
        %v2468 = vpop.xlane.xlu0 %2467
        %v2469 = vsel %vm2444, %v2365, 0.0
        %2470 = vadd.xlane.f32.xlu0 %v2469
        %v2471 = vpop.xlane.xlu0 %2470
        %v2472 = vsel %vm2444, %v2367, 0.0
        %2473 = vadd.xlane.f32.xlu0 %v2472
        %v2474 = vpop.xlane.xlu0 %2473
        %v2475 = vsel %vm2444, %v2369, 0.0
        %2476 = vadd.xlane.f32.xlu0 %v2475
        %v2477 = vpop.xlane.xlu0 %2476
        %v2478 = vsel %vm2444, %v2371, 0.0
        %2479 = vadd.xlane.f32.xlu0 %v2478
        %v2480 = vpop.xlane.xlu0 %2479
        %v2481 = vsel %vm2444, %v2373, 0.0
        %2482 = vadd.xlane.f32.xlu0 %v2481
        %v2483 = vpop.xlane.xlu0 %2482
        %v2484 = vsel %vm2444, %v2375, 0.0
        %2485 = vadd.xlane.f32.xlu0 %v2484
        %v2486 = vpop.xlane.xlu0 %2485
        %v2487 = vsel %vm2444, %v2377, 0.0
        %2488 = vadd.xlane.f32.xlu0 %v2487
        %v2489 = vpop.xlane.xlu0 %2488
        %v2490 = vsel %vm2444, %v2379, 0.0
        %2491 = vadd.xlane.f32.xlu0 %v2490
        %v2492 = vpop.xlane.xlu0 %2491
        %v2493 = vsel %vm2444, %v2381, 0.0
        %2494 = vadd.xlane.f32.xlu0 %v2493
        %v2495 = vpop.xlane.xlu0 %2494
        %v2496 = vsel %vm2444, %v2383, 0.0
        %2497 = vadd.xlane.f32.xlu0 %v2496
        %v2498 = vpop.xlane.xlu0 %2497
        %v2499 = vsel %vm2444, %v2385, 0.0
        %2500 = vadd.xlane.f32.xlu0 %v2499
        %v2501 = vpop.xlane.xlu0 %2500
        %v2502 = vsel %vm2444, %v2387, 0.0
        %2503 = vadd.xlane.f32.xlu0 %v2502
        %v2504 = vpop.xlane.xlu0 %2503
        %v2505 = vsel %vm2444, %v2389, 0.0
        %2506 = vadd.xlane.f32.xlu0 %v2505
        %v2507 = vpop.xlane.xlu0 %2506
        %v2508 = vsel %vm2444, %v2391, 0.0
        %2509 = vadd.xlane.f32.xlu0 %v2508
        %v2510 = vpop.xlane.xlu0 %2509
        %v2511 = vsel %vm2444, %v2393, 0.0
        %2512 = vadd.xlane.f32.xlu0 %v2511
        %v2513 = vpop.xlane.xlu0 %2512
        %v2514 = vsel %vm2444, %v2395, 0.0
        %2515 = vadd.xlane.f32.xlu0 %v2514
        %v2516 = vpop.xlane.xlu0 %2515
        %v2517 = vsel %vm2444, %v2397, 0.0
        %2518 = vadd.xlane.f32.xlu0 %v2517
        %v2519 = vpop.xlane.xlu0 %2518
        %v2520 = vsel %vm2444, %v2399, 0.0
        %2521 = vadd.xlane.f32.xlu0 %v2520
        %v2522 = vpop.xlane.xlu0 %2521
        %v2523 = vsel %vm2444, %v2401, 0.0
        %2524 = vadd.xlane.f32.xlu0 %v2523
        %v2525 = vpop.xlane.xlu0 %2524
        %v2526 = vsel %vm2444, %v2403, 0.0
        %2527 = vadd.xlane.f32.xlu0 %v2526
        %v2528 = vpop.xlane.xlu0 %2527
        %v2529 = vsel %vm2444, %v2405, 0.0
        %2530 = vadd.xlane.f32.xlu0 %v2529
        %v2531 = vpop.xlane.xlu0 %2530
        %v2532 = vsel %vm2444, %v2407, 0.0
        %2533 = vadd.xlane.f32.xlu0 %v2532
        %v2534 = vpop.xlane.xlu0 %2533
        %v2535 = vsel %vm2444, %v2409, 0.0
        %2536 = vadd.xlane.f32.xlu0 %v2535
        %v2537 = vpop.xlane.xlu0 %2536
        %v2538 = vsel %vm2444, %v2411, 0.0
        %2539 = vadd.xlane.f32.xlu0 %v2538
        %v2540 = vpop.xlane.xlu0 %2539
        %2541 = vxpose.xlu0.b32.start [1/16] %v2447, 128
        %2542 = vxpose.xlu0.b32.cont [2/16] %v2450, 128
        %2543 = vxpose.xlu0.b32.cont [3/16] %v2453, 128
        %2544 = vxpose.xlu0.b32.cont [4/16] %v2456, 128
        %2545 = vxpose.xlu0.b32.cont [5/16] %v2459, 128
        %2546 = vxpose.xlu0.b32.cont [6/16] %v2462, 128
        %2547 = vxpose.xlu0.b32.cont [7/16] %v2465, 128
        %2548 = vxpose.xlu0.b32.cont [8/16] %v2468, 128
        %2549 = vxpose.xlu0.b32.cont [9/16] %v2471, 128
        %2550 = vxpose.xlu0.b32.cont [10/16] %v2474, 128
        %2551 = vxpose.xlu0.b32.cont [11/16] %v2477, 128
        %2552 = vxpose.xlu0.b32.cont [12/16] %v2480, 128
        %2553 = vxpose.xlu0.b32.cont [13/16] %v2483, 128
        %2554 = vxpose.xlu0.b32.cont [14/16] %v2486, 128
        %2555 = vxpose.xlu0.b32.cont [15/16] %v2489, 128
        %2556 = vxpose.xlu0.b32.end [16/16] %v2492, 128
        %v2557 = vpop.trf.xlu0
        %v2558 = vpop.trf.xlu0
        %v2559 = vpop.trf.xlu0
        %v2560 = vpop.trf.xlu0
        %v2561 = vpop.trf.xlu0
        %v2562 = vpop.trf.xlu0
        %v2563 = vpop.trf.xlu0
        %v2564 = vpop.trf.xlu0
        %v2565 = vpop.trf.xlu0
        %v2566 = vpop.trf.xlu0
        %v2567 = vpop.trf.xlu0
        %v2568 = vpop.trf.xlu0
        %v2569 = vpop.trf.xlu0
        %v2570 = vpop.trf.xlu0
        %v2571 = vpop.trf.xlu0
        %v2572 = vpop.trf.xlu0
        %2573 = vxpose.xlu0.b32.start [1/16] %v2495, 128
        %2574 = vxpose.xlu0.b32.cont [2/16] %v2498, 128
        %2575 = vxpose.xlu0.b32.cont [3/16] %v2501, 128
        %2576 = vxpose.xlu0.b32.cont [4/16] %v2504, 128
        %2577 = vxpose.xlu0.b32.cont [5/16] %v2507, 128
        %2578 = vxpose.xlu0.b32.cont [6/16] %v2510, 128
        %2579 = vxpose.xlu0.b32.cont [7/16] %v2513, 128
        %2580 = vxpose.xlu0.b32.cont [8/16] %v2516, 128
        %2581 = vxpose.xlu0.b32.cont [9/16] %v2519, 128
        %2582 = vxpose.xlu0.b32.cont [10/16] %v2522, 128
        %2583 = vxpose.xlu0.b32.cont [11/16] %v2525, 128
        %2584 = vxpose.xlu0.b32.cont [12/16] %v2528, 128
        %2585 = vxpose.xlu0.b32.cont [13/16] %v2531, 128
        %2586 = vxpose.xlu0.b32.cont [14/16] %v2534, 128
        %2587 = vxpose.xlu0.b32.cont [15/16] %v2537, 128
        %2588 = vxpose.xlu0.b32.end [16/16] %v2540, 128
        %v2589 = vpop.trf.xlu0
        %v2590 = vpop.trf.xlu0
        %v2591 = vpop.trf.xlu0
        %v2592 = vpop.trf.xlu0
        %v2593 = vpop.trf.xlu0
        %v2594 = vpop.trf.xlu0
        %v2595 = vpop.trf.xlu0
        %v2596 = vpop.trf.xlu0
        %v2597 = vpop.trf.xlu0
        %v2598 = vpop.trf.xlu0
        %v2599 = vpop.trf.xlu0
        %v2600 = vpop.trf.xlu0
        %v2601 = vpop.trf.xlu0
        %v2602 = vpop.trf.xlu0
        %v2603 = vpop.trf.xlu0
        %v2604 = vpop.trf.xlu0
        %v2605 = vld [vmem:[%s5] sm:$0xff]
        %v2606 = vld [vmem:[%s5 + $0x8] sm:$0xff]
        %v2607 = vld [vmem:[%s5 + $0x10] sm:$0xff]
        %v2608 = vld [vmem:[%s5 + $0x18] sm:$0xff]
        %v2609 = vld [vmem:[%s5 + $0x20] sm:$0xff]
        %v2610 = vld [vmem:[%s5 + $0x28] sm:$0xff]
        %v2611 = vld [vmem:[%s5 + $0x30] sm:$0xff]
        %v2612 = vld [vmem:[%s5 + $0x38] sm:$0xff]
        %v2613 = vperm.slane %v2557, 0
        %v2614 = vperm.slane %v2589, 0
        %v2615 = vadd.f32 %v2613, %v2605
        %v2616 = vadd.f32 %v2614, %v2606
        %v2617 = vadd.f32 %v2613, %v2607
        %v2618 = vadd.f32 %v2614, %v2608
        %v2619 = vadd.f32 %v2613, %v2609
        %v2620 = vadd.f32 %v2614, %v2610
        %v2621 = vadd.f32 %v2613, %v2611
        %v2622 = vadd.f32 %v2614, %v2612
        %v2623 = vmax.f32 %v2615, %v2616
        %2624 = vmax.xlane.f32.xlu0 %v2623
        %v2625 = vpop.xlane.xlu0 %2624
        %v2626 = vmax.f32 %v2617, %v2618
        %2627 = vmax.xlane.f32.xlu0 %v2626
        %v2628 = vpop.xlane.xlu0 %2627
        %v2629 = vmax.f32 %v2619, %v2620
        %2630 = vmax.xlane.f32.xlu0 %v2629
        %v2631 = vpop.xlane.xlu0 %2630
        %v2632 = vmax.f32 %v2621, %v2622
        %2633 = vmax.xlane.f32.xlu0 %v2632
        %v2634 = vpop.xlane.xlu0 %2633
        %v2635 = vsub.f32 %v2615, %v2625
        %v2636 = vsub.f32 %v2616, %v2625
        %v2637 = vsub.f32 %v2617, %v2628
        %v2638 = vsub.f32 %v2618, %v2628
        %v2639 = vsub.f32 %v2619, %v2631
        %v2640 = vsub.f32 %v2620, %v2631
        %v2641 = vsub.f32 %v2621, %v2634
        %v2642 = vsub.f32 %v2622, %v2634
        %v2643 = vmul.f32 %v2635, 1.442695
        %v2644 = vpow.pop %v2643
        %v2645 = vmul.f32 %v2636, 1.442695
        %v2646 = vpow.pop %v2645
        %v2647 = vmul.f32 %v2637, 1.442695
        %v2648 = vpow.pop %v2647
        %v2649 = vmul.f32 %v2638, 1.442695
        %v2650 = vpow.pop %v2649
        %v2651 = vmul.f32 %v2639, 1.442695
        %v2652 = vpow.pop %v2651
        %v2653 = vmul.f32 %v2640, 1.442695
        %v2654 = vpow.pop %v2653
        %v2655 = vmul.f32 %v2641, 1.442695
        %v2656 = vpow.pop %v2655
        %v2657 = vmul.f32 %v2642, 1.442695
        %v2658 = vpow.pop %v2657
        %v2659 = vadd.f32 %v2644, %v2646
        %2660 = vadd.xlane.f32.xlu0 %v2659
        %v2661 = vpop.xlane.xlu0 %2660
        %v2662 = vadd.f32 %v2648, %v2650
        %2663 = vadd.xlane.f32.xlu0 %v2662
        %v2664 = vpop.xlane.xlu0 %2663
        %v2665 = vadd.f32 %v2652, %v2654
        %2666 = vadd.xlane.f32.xlu0 %v2665
        %v2667 = vpop.xlane.xlu0 %2666
        %v2668 = vadd.f32 %v2656, %v2658
        %2669 = vadd.xlane.f32.xlu0 %v2668
        %v2670 = vpop.xlane.xlu0 %2669
        %v2671 = vrcp.pop %v2661
        %v2672 = vrcp.pop %v2664
        %v2673 = vrcp.pop %v2667
        %v2674 = vrcp.pop %v2670
        %v2675 = vpack.c.bf16 %v2648, %v2644
        %v2676 = vpack.c.bf16 %v2650, %v2646
        %v2677 = vpack.c.bf16 %v2656, %v2652
        %v2678 = vpack.c.bf16 %v2658, %v2654
        %v2679 = vpack.c.bf16 %v2170, %v2168
        %v2680 = vpack.c.bf16 %v2175, %v2173
        %v2681 = vpack.c.bf16 %v2180, %v2178
        %v2682 = vpack.c.bf16 %v2185, %v2183
        %v2683 = vpack.c.bf16 %v2190, %v2188
        %v2684 = vpack.c.bf16 %v2195, %v2193
        %v2685 = vpack.c.bf16 %v2200, %v2198
        %v2686 = vpack.c.bf16 %v2205, %v2203
        %v2687 = vpack.c.bf16 %v2210, %v2208
        %v2688 = vpack.c.bf16 %v2215, %v2213
        %v2689 = vpack.c.bf16 %v2220, %v2218
        %v2690 = vpack.c.bf16 %v2225, %v2223
        %v2691 = vpack.c.bf16 %v2230, %v2228
        %v2692 = vpack.c.bf16 %v2235, %v2233
        %v2693 = vpack.c.bf16 %v2240, %v2238
        %v2694 = vpack.c.bf16 %v2245, %v2243
        %2695 = vmatpush.bf16.msra.mxu0 %v2686
        %2696 = vmatpush.bf16.msra.mxu0 %v2685
        %2697 = vmatpush.bf16.msra.mxu0 %v2684
        %2698 = vmatpush.bf16.msra.mxu0 %v2683
        %2699 = vmatpush.bf16.msra.mxu0 %v2682
        %2700 = vmatpush.bf16.msra.mxu0 %v2681
        %2701 = vmatpush.bf16.msra.mxu0 %v2680
        %2702 = vmatpush.bf16.msra.mxu0 %v2679
        %2703 = vmatmul.bf16.gmra.mxu0 %v2675
        %v2704 = vpop.f32.mrf.mxu0
        %v2705 = vadd.f32 0.0, %v2704
        %v2706 = vpop.f32.mrf.mxu0
        %v2707 = vadd.f32 0.0, %v2706
        %2708 = vmatmul.bf16.gmra.mxu0 %v2677
        %v2709 = vpop.f32.mrf.mxu0
        %v2710 = vadd.f32 0.0, %v2709
        %v2711 = vpop.f32.mrf.mxu0
        %v2712 = vadd.f32 0.0, %v2711
        %2713 = vdwg.mxu0
        %2714 = vmatpush.bf16.msra.mxu0 %v2694
        %2715 = vmatpush.bf16.msra.mxu0 %v2693
        %2716 = vmatpush.bf16.msra.mxu0 %v2692
        %2717 = vmatpush.bf16.msra.mxu0 %v2691
        %2718 = vmatpush.bf16.msra.mxu0 %v2690
        %2719 = vmatpush.bf16.msra.mxu0 %v2689
        %2720 = vmatpush.bf16.msra.mxu0 %v2688
        %2721 = vmatpush.bf16.msra.mxu0 %v2687
        %2722 = vmatmul.bf16.gmra.mxu0 %v2676
        %v2723 = vpop.f32.mrf.mxu0
        %v2724 = vadd.f32 %v2705, %v2723
        %v2725 = vpop.f32.mrf.mxu0
        %v2726 = vadd.f32 %v2707, %v2725
        %2727 = vmatmul.bf16.gmra.mxu0 %v2678
        %v2728 = vpop.f32.mrf.mxu0
        %v2729 = vadd.f32 %v2710, %v2728
        %v2730 = vpop.f32.mrf.mxu0
        %v2731 = vadd.f32 %v2712, %v2730
        %2732 = vdwg.mxu0
        %v2733 = vmul.f32 %v2724, %v2671
        %v2734 = vmul.f32 %v2726, %v2672
        %v2735 = vmul.f32 %v2729, %v2673
        %v2736 = vmul.f32 %v2731, %v2674
        %v2737 = vld [vmem:[%s6] sm:$0xf]
        %v2738 = vld [vmem:[%s6 + $0x4] sm:$0xf]
        %v2739 = vld [vmem:[%s6 + $0x8] sm:$0xf]
        %v2740 = vld [vmem:[%s6 + $0xc] sm:$0xf]
        %v2741 = vld [vmem:[%s6 + $0x10] sm:$0xf]
        %v2742 = vld [vmem:[%s6 + $0x14] sm:$0xf]
        %v2743 = vld [vmem:[%s6 + $0x18] sm:$0xf]
        %v2744 = vld [vmem:[%s6 + $0x1c] sm:$0xf]
        %v2745 = vld [vmem:[%s6 + $0x20] sm:$0xf]
        %v2746 = vld [vmem:[%s6 + $0x24] sm:$0xf]
        %v2747 = vld [vmem:[%s6 + $0x28] sm:$0xf]
        %v2748 = vld [vmem:[%s6 + $0x2c] sm:$0xf]
        %v2749 = vld [vmem:[%s6 + $0x30] sm:$0xf]
        %v2750 = vld [vmem:[%s6 + $0x34] sm:$0xf]
        %v2751 = vld [vmem:[%s6 + $0x38] sm:$0xf]
        %v2752 = vld [vmem:[%s6 + $0x3c] sm:$0xf]
        %v2753 = vld [vmem:[%s6 + $0x40] sm:$0xf]
        %v2754 = vld [vmem:[%s6 + $0x44] sm:$0xf]
        %v2755 = vld [vmem:[%s6 + $0x48] sm:$0xf]
        %v2756 = vld [vmem:[%s6 + $0x4c] sm:$0xf]
        %v2757 = vld [vmem:[%s6 + $0x50] sm:$0xf]
        %v2758 = vld [vmem:[%s6 + $0x54] sm:$0xf]
        %v2759 = vld [vmem:[%s6 + $0x58] sm:$0xf]
        %v2760 = vld [vmem:[%s6 + $0x5c] sm:$0xf]
        %v2761 = vld [vmem:[%s6 + $0x60] sm:$0xf]
        %v2762 = vld [vmem:[%s6 + $0x64] sm:$0xf]
        %v2763 = vld [vmem:[%s6 + $0x68] sm:$0xf]
        %v2764 = vld [vmem:[%s6 + $0x6c] sm:$0xf]
        %v2765 = vld [vmem:[%s6 + $0x70] sm:$0xf]
        %v2766 = vld [vmem:[%s6 + $0x74] sm:$0xf]
        %v2767 = vld [vmem:[%s6 + $0x78] sm:$0xf]
        %v2768 = vld [vmem:[%s6 + $0x7c] sm:$0xf]
        %v2801 = vunpack.c.l.b16 %v2737
        %v2802 = vunpack.c.l.b16 %v2738
        %v2803 = vunpack.c.l.b16 %v2739
        %v2804 = vunpack.c.l.b16 %v2740
        %v2805 = vunpack.c.l.b16 %v2741
        %v2806 = vunpack.c.l.b16 %v2742
        %v2807 = vunpack.c.l.b16 %v2743
        %v2808 = vunpack.c.l.b16 %v2744
        %v2809 = vunpack.c.l.b16 %v2745
        %v2810 = vunpack.c.l.b16 %v2746
        %v2811 = vunpack.c.l.b16 %v2747
        %v2812 = vunpack.c.l.b16 %v2748
        %v2813 = vunpack.c.l.b16 %v2749
        %v2814 = vunpack.c.l.b16 %v2750
        %v2815 = vunpack.c.l.b16 %v2751
        %v2816 = vunpack.c.l.b16 %v2752
        %v2817 = vunpack.c.l.b16 %v2753
        %v2818 = vunpack.c.l.b16 %v2754
        %v2819 = vunpack.c.l.b16 %v2755
        %v2820 = vunpack.c.l.b16 %v2756
        %v2821 = vunpack.c.l.b16 %v2757
        %v2822 = vunpack.c.l.b16 %v2758
        %v2823 = vunpack.c.l.b16 %v2759
        %v2824 = vunpack.c.l.b16 %v2760
        %v2825 = vunpack.c.l.b16 %v2761
        %v2826 = vunpack.c.l.b16 %v2762
        %v2827 = vunpack.c.l.b16 %v2763
        %v2828 = vunpack.c.l.b16 %v2764
        %v2829 = vunpack.c.l.b16 %v2765
        %v2830 = vunpack.c.l.b16 %v2766
        %v2831 = vunpack.c.l.b16 %v2767
        %v2832 = vunpack.c.l.b16 %v2768
        %v2833 = vpack.c.b16 %v2802, %v2801
        %v2834 = vpack.c.b16 %v2804, %v2803
        %v2835 = vpack.c.b16 %v2806, %v2805
        %v2836 = vpack.c.b16 %v2808, %v2807
        %v2837 = vpack.c.b16 %v2810, %v2809
        %v2838 = vpack.c.b16 %v2812, %v2811
        %v2839 = vpack.c.b16 %v2814, %v2813
        %v2840 = vpack.c.b16 %v2816, %v2815
        %v2841 = vpack.c.b16 %v2818, %v2817
        %v2842 = vpack.c.b16 %v2820, %v2819
        %v2843 = vpack.c.b16 %v2822, %v2821
        %v2844 = vpack.c.b16 %v2824, %v2823
        %v2845 = vpack.c.b16 %v2826, %v2825
        %v2846 = vpack.c.b16 %v2828, %v2827
        %v2847 = vpack.c.b16 %v2830, %v2829
        %v2848 = vpack.c.b16 %v2832, %v2831
        %2865 = vmatpush.bf16.msra.mxu0 %v2840
        %2866 = vmatpush.bf16.msra.mxu0 %v2839
        %2867 = vmatpush.bf16.msra.mxu0 %v2838
        %2868 = vmatpush.bf16.msra.mxu0 %v2837
        %2869 = vmatpush.bf16.msra.mxu0 %v2836
        %2870 = vmatpush.bf16.msra.mxu0 %v2835
        %2871 = vmatpush.bf16.msra.mxu0 %v2834
        %2872 = vmatpush.bf16.msra.mxu0 %v2833
        %2873 = vmatmul.bf16.gmra.mxu0 %v2675
        %v2874 = vpop.f32.mrf.mxu0
        %v2875 = vadd.f32 0.0, %v2874
        %v2876 = vpop.f32.mrf.mxu0
        %v2877 = vadd.f32 0.0, %v2876
        %2878 = vmatmul.bf16.gmra.mxu0 %v2677
        %v2879 = vpop.f32.mrf.mxu0
        %v2880 = vadd.f32 0.0, %v2879
        %v2881 = vpop.f32.mrf.mxu0
        %v2882 = vadd.f32 0.0, %v2881
        %2883 = vdwg.mxu0
        %2884 = vmatpush.bf16.msra.mxu0 %v2848
        %2885 = vmatpush.bf16.msra.mxu0 %v2847
        %2886 = vmatpush.bf16.msra.mxu0 %v2846
        %2887 = vmatpush.bf16.msra.mxu0 %v2845
        %2888 = vmatpush.bf16.msra.mxu0 %v2844
        %2889 = vmatpush.bf16.msra.mxu0 %v2843
        %2890 = vmatpush.bf16.msra.mxu0 %v2842
        %2891 = vmatpush.bf16.msra.mxu0 %v2841
        %2892 = vmatmul.bf16.gmra.mxu0 %v2676
        %v2893 = vpop.f32.mrf.mxu0
        %v2894 = vadd.f32 %v2875, %v2893
        %v2895 = vpop.f32.mrf.mxu0
        %v2896 = vadd.f32 %v2877, %v2895
        %2897 = vmatmul.bf16.gmra.mxu0 %v2678
        %v2898 = vpop.f32.mrf.mxu0
        %v2899 = vadd.f32 %v2880, %v2898
        %v2900 = vpop.f32.mrf.mxu0
        %v2901 = vadd.f32 %v2882, %v2900
        %2902 = vdwg.mxu0
        %v2903 = vmul.f32 %v2894, %v2671
        %v2904 = vmul.f32 %v2896, %v2672
        %v2905 = vmul.f32 %v2899, %v2673
        %v2906 = vmul.f32 %v2901, %v2674
        %v2907 = vperm.slane %v287, 0
        %v2909 = vsel %vm1373, %v2733, 0
        %v2912 = vsel %vm1373, %v2734, 0
        %v2915 = vsel %vm1373, %v2735, 0
        %v2918 = vsel %vm1373, %v2736, 0
        %2920 = vmatpush.msra.mxu0 0.0
        %2921 = vmatpush.msra.mxu0 0.0
        %2922 = vmatpush.msra.mxu0 0.0
        %2923 = vmatpush.msra.mxu0 0.0
        %2924 = vmatpush.msra.mxu0 0.0
        %2925 = vmatpush.msra.mxu0 0.0
        %2926 = vmatpush.msra.mxu0 0.0
        %2927 = vmatpush.msra.mxu0 0.0
        %2928 = vmatpush.msra.mxu0 0.0
        %2929 = vmatpush.msra.mxu0 0.0
        %2930 = vmatpush.msra.mxu0 0.0
        %2931 = vmatpush.msra.mxu0 0.0
        %2932 = vmatpush.msra.mxu0 0.0
        %2933 = vmatpush.msra.mxu0 0.0
        %2934 = vmatpush.msra.mxu0 %v290
        %2935 = vmatpush.msra.mxu0 %v289
        %2936 = vmatmul.f32.gmra.mxu0 %v2909
        %v2937 = vpop.f32.mrf.mxu0
        %v2938 = vadd.f32 %v2907, %v2937
        %2939 = vmatmul.f32.gmra.mxu0 %v2912
        %v2940 = vpop.f32.mrf.mxu0
        %v2941 = vadd.f32 %v2907, %v2940
        %2942 = vmatmul.f32.gmra.mxu0 %v2915
        %v2943 = vpop.f32.mrf.mxu0
        %v2944 = vadd.f32 %v2907, %v2943
        %2945 = vmatmul.f32.gmra.mxu0 %v2918
        %v2946 = vpop.f32.mrf.mxu0
        %v2947 = vadd.f32 %v2907, %v2946
        %2948 = vdwg.mxu0
        %v2949 = vmax.f32 %v2938, 0.0
        %v2950 = vmax.f32 %v2941, 0.0
        %v2951 = vmax.f32 %v2944, 0.0
        %v2952 = vmax.f32 %v2947, 0.0
        %v2953 = vperm.slane %v288, 0
        %v2955 = vsel %vm2444, %v2949, 0
        %v2958 = vsel %vm2444, %v2950, 0
        %v2961 = vsel %vm2444, %v2951, 0
        %v2964 = vsel %vm2444, %v2952, 0
        %2966 = vmatpush.msra.mxu0 0.0
        %2967 = vmatpush.msra.mxu0 0.0
        %2968 = vmatpush.msra.mxu0 0.0
        %2969 = vmatpush.msra.mxu0 0.0
        %2970 = vmatpush.msra.mxu0 0.0
        %2971 = vmatpush.msra.mxu0 0.0
        %2972 = vmatpush.msra.mxu0 0.0
        %2973 = vmatpush.msra.mxu0 0.0
        %2974 = vmatpush.msra.mxu0 0.0
        %2975 = vmatpush.msra.mxu0 0.0
        %2976 = vmatpush.msra.mxu0 0.0
        %2977 = vmatpush.msra.mxu0 0.0
        %2978 = vmatpush.msra.mxu0 0.0
        %2979 = vmatpush.msra.mxu0 0.0
        %2980 = vmatpush.msra.mxu0 0.0
        %2981 = vmatpush.msra.mxu0 %v291
        %2982 = vmatmul.f32.gmra.mxu0 %v2955
        %v2983 = vpop.f32.mrf.mxu0
        %v2984 = vadd.f32 %v2953, %v2983
        %2985 = vmatmul.f32.gmra.mxu0 %v2958
        %v2986 = vpop.f32.mrf.mxu0
        %v2987 = vadd.f32 %v2953, %v2986
        %2988 = vmatmul.f32.gmra.mxu0 %v2961
        %v2989 = vpop.f32.mrf.mxu0
        %v2990 = vadd.f32 %v2953, %v2989
        %2991 = vmatmul.f32.gmra.mxu0 %v2964
        %v2992 = vpop.f32.mrf.mxu0
        %v2993 = vadd.f32 %v2953, %v2992
        %2994 = vdwg.mxu0
        %v2995 = vadd.f32 %v2984, %v2903
        %v2996 = vadd.f32 %v2987, %v2904
        %v2997 = vadd.f32 %v2990, %v2905
        %v2998 = vadd.f32 %v2993, %v2906
        %2999 = vst [vmem:[%s274] sm:$0xff] %v2995
        %3000 = vst [vmem:[%s274 + $0x8] sm:$0xff] %v2996
        %3001 = vst [vmem:[%s274 + $0x10] sm:$0xff] %v2997
        %3002 = vst [vmem:[%s274 + $0x18] sm:$0xff] %v2998
        %s3003 = sand.u32 %s181, 1
        %s3004 = scalar_lea.sflag [#allocation3], %s3003
        %s3005 = sand.u32 %s181, 1
        %s3006 = smul.addr %s3005, 32
        %s3007 = scalar_lea.vmem [#allocation2], %s3006
        // Predicated region
        $region49: #{tpu_custom_call.1} parent=47 // pred_check
          %p3008 = pneg %p191
        $region50: #{tpu_custom_call.1} parent=47 // pred_check_branch
          %3010 = sbr.rel (%p3008) target = $region52
        $region51: #{tpu_custom_call.1} parent=47 // pred_region
          %s3011 = smul.u32 4, %s21
          %3013 = vsyncadd %s3004, 0
          %s3014 = smul.addr %s3011, 8
          %s3015 = scalar_lea.hbm %s7, %s3014
          %s3016 = sshll.u32 %s3007, 4
          %s3017 = int_to_ptr.vmem [resolvable:$true] %s3016
          %s3018 = sshll.u32 %s3015, 4
          %s3019 = int_to_ptr.hbm [resolvable:$true] %s3018
          %3024 = dma.vmem_to_hbm [thread:$0]  %s3017, 512, %s3019, %s3004, 128, 128, 8
        $region52: #{tpu_custom_call.1} parent=47 // pred_fallthru
          _
      $region48: #{tpu_custom_call.1} parent=5 // pred_fallthru
        _
      %p3025 = scmp.le.s32.totalorder 2, %s16
      // Predicated region
      $region53: #{tpu_custom_call.1} parent=5 // pred_check
        %p3026 = pneg %p3025
      $region54: #{tpu_custom_call.1} parent=5 // pred_check_branch
        %3028 = sbr.rel (%p3026) target = $region56
      $region55: #{tpu_custom_call.1} parent=5 // pred_region
        %s3029 = ssub.s32 %s16, 2
        // Predicated region
        $region57: #{tpu_custom_call.1} parent=55 // pred_check
          %p3030 = pneg %p197
        $region58: #{tpu_custom_call.1} parent=55 // pred_check_branch
          %3032 = sbr.rel (%p3030) target = $region60
        $region59: #{tpu_custom_call.1} parent=55 // pred_region
          %s3033 = sand.u32 %s182, 1
          %s3034 = scalar_lea.sflag [#allocation3], %s3033
          %s3035 = sand.u32 %s182, 1
          %s3036 = smul.addr %s3035, 32
          %s3037 = scalar_lea.vmem [#allocation2], %s3036
          %3039 = dma.done %s3034, 512
        $region60: #{tpu_custom_call.1} parent=55 // pred_fallthru
          _
      $region56: #{tpu_custom_call.1} parent=5 // pred_fallthru
        _
    $region6: #{tpu_custom_call.1} parent=1 // loop_footer
      %s20 = sadd.s32 1, %s16
    $region7: #{tpu_custom_call.1} parent=1 // loop_footer_branch
      %15 = sbr.rel target = $region3
    $region8: #{tpu_custom_call.1} parent=1 // loop_exit
      _
    %3040 = vsyncpa [#allocation3], 1
    %s3041 = scalar_lea.sflag [#allocation3], 1
    %3042 = vsyncpa %s3041, 1

</llo_original>
